<compile_context>
chip_gen: v7x
topology: tpu7x:2x2x1
jax: 0.10.0
libtpu: 0.0.40
codegen_flags: <defaults>
</compile_context>

<pallas_src>
import jax
import jax.numpy as jnp
from jax.experimental import pallas as pl
from jax.experimental.pallas import tpu as pltpu


def _make_gru_fc_kernel(B, T):
    """Build the fused GRU + fc kernel with static batch/seq dims bound."""

    def kernel(x_ref,
               wih_r_ref, wih_z_ref, wih_n_ref,
               whh_r_ref, whh_z_ref, whh_n_ref,
               bih_r_ref, bih_z_ref, bih_n_ref,
               bhh_r_ref, bhh_z_ref, bhh_n_ref,
               wfc_ref, bfc_ref, out_ref):
        # x_ref:      (B*T, D)  flattened batch-major input
        # wih_*_ref:  (D, H)    per-gate input weights (lane-0 aligned)
        # whh_*_ref:  (H, H)    per-gate hidden weights
        # bih_*_ref:  (1, H)    per-gate input biases
        # bhh_*_ref:  (1, H)    per-gate hidden biases
        # wfc_ref:    (H, C)    fc weight (transposed)   bfc_ref: (1, C)
        # out_ref:    (B, C)
        H = whh_r_ref.shape[0]
        x_flat = x_ref[...]  # (B*T, D)

        # ---- hoisted input projection: one matmul per gate, all T steps ----
        # Biases that live OUTSIDE the r* term (b_ih_* and b_hh_r/b_hh_z) are
        # folded here, in the prologue, off the recurrence critical path.
        def in_proj(w_ref, *b_refs):
            g = jnp.dot(x_flat, w_ref[...], preferred_element_type=jnp.float32)
            for b_ref in b_refs:
                g = g + b_ref[...]
            return g.reshape(B, T, H)   # batch-major rows -> (B, T, H)

        gi_r = in_proj(wih_r_ref, bih_r_ref, bhh_r_ref)
        gi_z = in_proj(wih_z_ref, bih_z_ref, bhh_z_ref)
        gi_n = in_proj(wih_n_ref, bih_n_ref)

        whh_r = whh_r_ref[...]
        whh_z = whh_z_ref[...]
        whh_n = whh_n_ref[...]

        # b_hh_n must stay inside the loop (PyTorch: r * (h W_hn + b_hn)), but
        # its broadcast is hoisted once (JAX does not CSE broadcast_in_dim).
        bhh_n = jnp.broadcast_to(bhh_n_ref[...], (B, H))

        # ---- recurrence: fully unrolled static time loop (T is small) ----
        h = jnp.zeros((B, H), jnp.float32)
        for t in range(T):
            gh_r = jnp.dot(h, whh_r, preferred_element_type=jnp.float32)
            gh_z = jnp.dot(h, whh_z, preferred_element_type=jnp.float32)
            gh_n = jnp.dot(h, whh_n, preferred_element_type=jnp.float32) + bhh_n
            r = jax.nn.sigmoid(gi_r[:, t, :] + gh_r)
            z = jax.nn.sigmoid(gi_z[:, t, :] + gh_z)
            n = jnp.tanh(gi_n[:, t, :] + r * gh_n)
            h = (1.0 - z) * n + z * h

        # Final linear on the last hidden state.  (B, C) = (2, 4) masked store
        # is accepted at these tiny shapes.
        out_ref[...] = (jnp.dot(h, wfc_ref[...],
                                preferred_element_type=jnp.float32)
                        + bfc_ref[...])

    return kernel


@jax.jit
def gru_model_forward(x, params):
    """x: (B, T, D) float32, batch_first like the PyTorch module."""
    B, T, D = x.shape
    H = params["whh_t"].shape[0]
    C = params["wfc_t"].shape[1]

    # Free row-major merge; no (B,T,D)->(T,B,D) transpose / HBM round trip.
    x_flat = x.astype(jnp.float32).reshape(B * T, D)

    # Split combined [r|z|n] weights/biases into per-gate, lane-0-aligned blocks.
    wih_t, whh_t = params["wih_t"], params["whh_t"]
    bih, bhh = params["bih"], params["bhh"]
    wih_r, wih_z, wih_n = wih_t[:, :H], wih_t[:, H:2 * H], wih_t[:, 2 * H:]
    whh_r, whh_z, whh_n = whh_t[:, :H], whh_t[:, H:2 * H], whh_t[:, 2 * H:]
    bih_r, bih_z, bih_n = bih[:, :H], bih[:, H:2 * H], bih[:, 2 * H:]
    bhh_r, bhh_z, bhh_n = bhh[:, :H], bhh[:, H:2 * H], bhh[:, 2 * H:]

    vmem = pl.BlockSpec(memory_space=pltpu.MemorySpace.VMEM)
    kernel = _make_gru_fc_kernel(B, T)
    return pl.pallas_call(
        kernel,
        out_shape=jax.ShapeDtypeStruct((B, C), jnp.float32),
        in_specs=[vmem] * 15,
        out_specs=vmem,
    )(
        x_flat,
        wih_r, wih_z, wih_n,
        whh_r, whh_z, whh_n,
        bih_r, bih_z, bih_n,
        bhh_r, bhh_z, bhh_n,
        params["wfc_t"], params["bfc"],
    )


def gru_model_reference(x, params):
    """Pure-JAX reference matching PyTorch nn.GRU(batch_first) + Linear."""
    B, T, D = x.shape
    H = params["whh_t"].shape[0]
    wih, whh = params["wih_t"], params["whh_t"]
    bih, bhh = params["bih"], params["bhh"]
    h = jnp.zeros((B, H), jnp.float32)
    for t in range(T):
        x_t = x[:, t, :]
        gi = x_t @ wih + bih
        gh = h @ whh + bhh
        r = jax.nn.sigmoid(gi[:, 0:H] + gh[:, 0:H])
        z = jax.nn.sigmoid(gi[:, H:2 * H] + gh[:, H:2 * H])
        n = jnp.tanh(gi[:, 2 * H:3 * H] + r * gh[:, 2 * H:3 * H])
        h = (1.0 - z) * n + z * h
    return h @ params["wfc_t"] + params["bfc"]


def init_params(key, input_size, hidden_size, num_classes):
    """Deterministic params with PyTorch-style U(-1/sqrt(H), 1/sqrt(H)) init."""
    ks = jax.random.split(key, 7)
    bound = 1.0 / jnp.sqrt(jnp.float32(hidden_size))
    u = lambda k, shape: jax.random.uniform(
        k, shape, jnp.float32, minval=-bound, maxval=bound)
    return {
        # PyTorch weight_ih_l0 is (3H, D); we store its transpose (D, 3H).
        "wih_t": u(ks[0], (input_size, 3 * hidden_size)),
        "whh_t": u(ks[1], (hidden_size, 3 * hidden_size)),
        "bih": u(ks[2], (1, 3 * hidden_size)),
        "bhh": u(ks[3], (1, 3 * hidden_size)),
        # PyTorch fc.weight is (C, H); we store its transpose (H, C).
        "wfc_t": u(ks[4], (hidden_size, num_classes)),
        "bfc": u(ks[5], (1, num_classes)),
    }


if __name__ == "__main__":
    B, T, D, H, C = 2, 8, 16, 32, 4  # batch, seq, input_size, hidden_size, classes

    key = jax.random.PRNGKey(0)
    kx, kp = jax.random.split(key)
    x = jax.random.normal(kx, (B, T, D), jnp.float32)
    params = init_params(kp, D, H, C)

    out = gru_model_forward(x, params)
    out = jax.block_until_ready(out)

    ref = gru_model_reference(x, params)
    assert out.shape == (B, C)
    assert bool(jnp.allclose(out, ref, atol=1e-5, rtol=1e-5)), "mismatch vs reference"

    print("KERNEL_OK")
</pallas_src>

<mosaic_0001>
module attributes {stable_mosaic.version = 11 : i64} {
  func.func @kernel(%arg0: memref<16x16xf32, #tpu.memory_space<vmem>>, %arg1: memref<16x32xf32, #tpu.memory_space<vmem>>, %arg2: memref<16x32xf32, #tpu.memory_space<vmem>>, %arg3: memref<16x32xf32, #tpu.memory_space<vmem>>, %arg4: memref<32x32xf32, #tpu.memory_space<vmem>>, %arg5: memref<32x32xf32, #tpu.memory_space<vmem>>, %arg6: memref<32x32xf32, #tpu.memory_space<vmem>>, %arg7: memref<1x32xf32, #tpu.memory_space<vmem>>, %arg8: memref<1x32xf32, #tpu.memory_space<vmem>>, %arg9: memref<1x32xf32, #tpu.memory_space<vmem>>, %arg10: memref<1x32xf32, #tpu.memory_space<vmem>>, %arg11: memref<1x32xf32, #tpu.memory_space<vmem>>, %arg12: memref<1x32xf32, #tpu.memory_space<vmem>>, %arg13: memref<32x4xf32, #tpu.memory_space<vmem>>, %arg14: memref<1x4xf32, #tpu.memory_space<vmem>>, %arg15: memref<2x4xf32, #tpu.memory_space<vmem>>) attributes {dimension_semantics = [], scalar_prefetch = 0 : i64, scratch_operands = 0 : i64, tpu.core_type = #tpu.core_type<tc>} {
    %c0 = arith.constant 0 : index
    %c0_0 = arith.constant 0 : index
    %0 = vector.load %arg0[%c0, %c0_0] : memref<16x16xf32, #tpu.memory_space<vmem>>, vector<16x16xf32>
    %c0_1 = arith.constant 0 : index
    %c0_2 = arith.constant 0 : index
    %1 = vector.load %arg1[%c0_1, %c0_2] : memref<16x32xf32, #tpu.memory_space<vmem>>, vector<16x32xf32>
    %cst = arith.constant dense<0.000000e+00> : vector<16x32xf32>
    %2 = tpu.matmul %0, %1, %cst {dimension_numbers = #tpu.dot_dimension_numbers<[1], [0], [0], [1], [0, 0, 1, 1], [], []>} : vector<16x16xf32>, vector<16x32xf32>, vector<16x32xf32> -> vector<16x32xf32>
    %c0_3 = arith.constant 0 : index
    %c0_4 = arith.constant 0 : index
    %3 = vector.load %arg7[%c0_3, %c0_4] : memref<1x32xf32, #tpu.memory_space<vmem>>, vector<1x32xf32>
    %4 = vector.broadcast %3 : vector<1x32xf32> to vector<16x32xf32>
    %5 = arith.addf %2, %4 : vector<16x32xf32>
    %c0_5 = arith.constant 0 : index
    %c0_6 = arith.constant 0 : index
    %6 = vector.load %arg10[%c0_5, %c0_6] : memref<1x32xf32, #tpu.memory_space<vmem>>, vector<1x32xf32>
    %7 = vector.broadcast %6 : vector<1x32xf32> to vector<16x32xf32>
    %8 = arith.addf %5, %7 : vector<16x32xf32>
    %9 = vector.shape_cast %8 : vector<16x32xf32> to vector<2x8x32xf32>
    %c0_7 = arith.constant 0 : index
    %c0_8 = arith.constant 0 : index
    %10 = vector.load %arg2[%c0_7, %c0_8] : memref<16x32xf32, #tpu.memory_space<vmem>>, vector<16x32xf32>
    %cst_9 = arith.constant dense<0.000000e+00> : vector<16x32xf32>
    %11 = tpu.matmul %0, %10, %cst_9 {dimension_numbers = #tpu.dot_dimension_numbers<[1], [0], [0], [1], [0, 0, 1, 1], [], []>} : vector<16x16xf32>, vector<16x32xf32>, vector<16x32xf32> -> vector<16x32xf32>
    %c0_10 = arith.constant 0 : index
    %c0_11 = arith.constant 0 : index
    %12 = vector.load %arg8[%c0_10, %c0_11] : memref<1x32xf32, #tpu.memory_space<vmem>>, vector<1x32xf32>
    %13 = vector.broadcast %12 : vector<1x32xf32> to vector<16x32xf32>
    %14 = arith.addf %11, %13 : vector<16x32xf32>
    %c0_12 = arith.constant 0 : index
    %c0_13 = arith.constant 0 : index
    %15 = vector.load %arg11[%c0_12, %c0_13] : memref<1x32xf32, #tpu.memory_space<vmem>>, vector<1x32xf32>
    %16 = vector.broadcast %15 : vector<1x32xf32> to vector<16x32xf32>
    %17 = arith.addf %14, %16 : vector<16x32xf32>
    %18 = vector.shape_cast %17 : vector<16x32xf32> to vector<2x8x32xf32>
    %c0_14 = arith.constant 0 : index
    %c0_15 = arith.constant 0 : index
    %19 = vector.load %arg3[%c0_14, %c0_15] : memref<16x32xf32, #tpu.memory_space<vmem>>, vector<16x32xf32>
    %cst_16 = arith.constant dense<0.000000e+00> : vector<16x32xf32>
    %20 = tpu.matmul %0, %19, %cst_16 {dimension_numbers = #tpu.dot_dimension_numbers<[1], [0], [0], [1], [0, 0, 1, 1], [], []>} : vector<16x16xf32>, vector<16x32xf32>, vector<16x32xf32> -> vector<16x32xf32>
    %c0_17 = arith.constant 0 : index
    %c0_18 = arith.constant 0 : index
    %21 = vector.load %arg9[%c0_17, %c0_18] : memref<1x32xf32, #tpu.memory_space<vmem>>, vector<1x32xf32>
    %22 = vector.broadcast %21 : vector<1x32xf32> to vector<16x32xf32>
    %23 = arith.addf %20, %22 : vector<16x32xf32>
    %24 = vector.shape_cast %23 : vector<16x32xf32> to vector<2x8x32xf32>
    %c0_19 = arith.constant 0 : index
    %c0_20 = arith.constant 0 : index
    %25 = vector.load %arg4[%c0_19, %c0_20] : memref<32x32xf32, #tpu.memory_space<vmem>>, vector<32x32xf32>
    %c0_21 = arith.constant 0 : index
    %c0_22 = arith.constant 0 : index
    %26 = vector.load %arg5[%c0_21, %c0_22] : memref<32x32xf32, #tpu.memory_space<vmem>>, vector<32x32xf32>
    %c0_23 = arith.constant 0 : index
    %c0_24 = arith.constant 0 : index
    %27 = vector.load %arg6[%c0_23, %c0_24] : memref<32x32xf32, #tpu.memory_space<vmem>>, vector<32x32xf32>
    %c0_25 = arith.constant 0 : index
    %c0_26 = arith.constant 0 : index
    %28 = vector.load %arg12[%c0_25, %c0_26] : memref<1x32xf32, #tpu.memory_space<vmem>>, vector<1x32xf32>
    %29 = vector.shape_cast %28 : vector<1x32xf32> to vector<1x32xf32>
    %30 = vector.broadcast %29 : vector<1x32xf32> to vector<2x32xf32>
    %cst_27 = arith.constant 0.000000e+00 : f32
    %31 = vector.broadcast %cst_27 : f32 to vector<2x32xf32>
    %cst_28 = arith.constant dense<0.000000e+00> : vector<2x32xf32>
    %32 = tpu.matmul %31, %25, %cst_28 {dimension_numbers = #tpu.dot_dimension_numbers<[1], [0], [0], [1], [0, 0, 1, 1], [], []>} : vector<2x32xf32>, vector<32x32xf32>, vector<2x32xf32> -> vector<2x32xf32>
    %cst_29 = arith.constant dense<0.000000e+00> : vector<2x32xf32>
    %33 = tpu.matmul %31, %26, %cst_29 {dimension_numbers = #tpu.dot_dimension_numbers<[1], [0], [0], [1], [0, 0, 1, 1], [], []>} : vector<2x32xf32>, vector<32x32xf32>, vector<2x32xf32> -> vector<2x32xf32>
    %cst_30 = arith.constant dense<0.000000e+00> : vector<2x32xf32>
    %34 = tpu.matmul %31, %27, %cst_30 {dimension_numbers = #tpu.dot_dimension_numbers<[1], [0], [0], [1], [0, 0, 1, 1], [], []>} : vector<2x32xf32>, vector<32x32xf32>, vector<2x32xf32> -> vector<2x32xf32>
    %35 = arith.addf %34, %30 : vector<2x32xf32>
    %36 = vector.extract_strided_slice %9 {offsets = [0, 0, 0], sizes = [2, 1, 32], strides = [1, 1, 1]} : vector<2x8x32xf32> to vector<2x1x32xf32>
    %37 = vector.shape_cast %36 : vector<2x1x32xf32> to vector<2x32xf32>
    %38 = arith.addf %37, %32 : vector<2x32xf32>
    %39 = arith.negf %38 : vector<2x32xf32>
    %40 = math.exp %39 : vector<2x32xf32>
    %cst_31 = arith.constant 1.000000e+00 : f32
    %41 = vector.broadcast %cst_31 : f32 to vector<2x32xf32>
    %42 = arith.addf %41, %40 : vector<2x32xf32>
    %43 = arith.divf %41, %42 : vector<2x32xf32>
    %44 = vector.extract_strided_slice %18 {offsets = [0, 0, 0], sizes = [2, 1, 32], strides = [1, 1, 1]} : vector<2x8x32xf32> to vector<2x1x32xf32>
    %45 = vector.shape_cast %44 : vector<2x1x32xf32> to vector<2x32xf32>
    %46 = arith.addf %45, %33 : vector<2x32xf32>
    %47 = arith.negf %46 : vector<2x32xf32>
    %48 = math.exp %47 : vector<2x32xf32>
    %cst_32 = arith.constant 1.000000e+00 : f32
    %49 = vector.broadcast %cst_32 : f32 to vector<2x32xf32>
    %50 = arith.addf %49, %48 : vector<2x32xf32>
    %51 = arith.divf %49, %50 : vector<2x32xf32>
    %52 = vector.extract_strided_slice %24 {offsets = [0, 0, 0], sizes = [2, 1, 32], strides = [1, 1, 1]} : vector<2x8x32xf32> to vector<2x1x32xf32>
    %53 = vector.shape_cast %52 : vector<2x1x32xf32> to vector<2x32xf32>
    %54 = arith.mulf %43, %35 : vector<2x32xf32>
    %55 = arith.addf %53, %54 : vector<2x32xf32>
    %56 = math.tanh %55 : vector<2x32xf32>
    %cst_33 = arith.constant 1.000000e+00 : f32
    %57 = vector.broadcast %cst_33 : f32 to vector<2x32xf32>
    %58 = arith.subf %57, %51 : vector<2x32xf32>
    %59 = arith.mulf %58, %56 : vector<2x32xf32>
    %60 = arith.mulf %51, %31 : vector<2x32xf32>
    %61 = arith.addf %59, %60 : vector<2x32xf32>
    %cst_34 = arith.constant dense<0.000000e+00> : vector<2x32xf32>
    %62 = tpu.matmul %61, %25, %cst_34 {dimension_numbers = #tpu.dot_dimension_numbers<[1], [0], [0], [1], [0, 0, 1, 1], [], []>} : vector<2x32xf32>, vector<32x32xf32>, vector<2x32xf32> -> vector<2x32xf32>
    %cst_35 = arith.constant dense<0.000000e+00> : vector<2x32xf32>
    %63 = tpu.matmul %61, %26, %cst_35 {dimension_numbers = #tpu.dot_dimension_numbers<[1], [0], [0], [1], [0, 0, 1, 1], [], []>} : vector<2x32xf32>, vector<32x32xf32>, vector<2x32xf32> -> vector<2x32xf32>
    %cst_36 = arith.constant dense<0.000000e+00> : vector<2x32xf32>
    %64 = tpu.matmul %61, %27, %cst_36 {dimension_numbers = #tpu.dot_dimension_numbers<[1], [0], [0], [1], [0, 0, 1, 1], [], []>} : vector<2x32xf32>, vector<32x32xf32>, vector<2x32xf32> -> vector<2x32xf32>
    %65 = arith.addf %64, %30 : vector<2x32xf32>
    %66 = vector.extract_strided_slice %9 {offsets = [0, 1, 0], sizes = [2, 1, 32], strides = [1, 1, 1]} : vector<2x8x32xf32> to vector<2x1x32xf32>
    %67 = vector.shape_cast %66 : vector<2x1x32xf32> to vector<2x32xf32>
    %68 = arith.addf %67, %62 : vector<2x32xf32>
    %69 = arith.negf %68 : vector<2x32xf32>
    %70 = math.exp %69 : vector<2x32xf32>
    %cst_37 = arith.constant 1.000000e+00 : f32
    %71 = vector.broadcast %cst_37 : f32 to vector<2x32xf32>
    %72 = arith.addf %71, %70 : vector<2x32xf32>
    %73 = arith.divf %71, %72 : vector<2x32xf32>
    %74 = vector.extract_strided_slice %18 {offsets = [0, 1, 0], sizes = [2, 1, 32], strides = [1, 1, 1]} : vector<2x8x32xf32> to vector<2x1x32xf32>
    %75 = vector.shape_cast %74 : vector<2x1x32xf32> to vector<2x32xf32>
    %76 = arith.addf %75, %63 : vector<2x32xf32>
    %77 = arith.negf %76 : vector<2x32xf32>
    %78 = math.exp %77 : vector<2x32xf32>
    %cst_38 = arith.constant 1.000000e+00 : f32
    %79 = vector.broadcast %cst_38 : f32 to vector<2x32xf32>
    %80 = arith.addf %79, %78 : vector<2x32xf32>
    %81 = arith.divf %79, %80 : vector<2x32xf32>
    %82 = vector.extract_strided_slice %24 {offsets = [0, 1, 0], sizes = [2, 1, 32], strides = [1, 1, 1]} : vector<2x8x32xf32> to vector<2x1x32xf32>
    %83 = vector.shape_cast %82 : vector<2x1x32xf32> to vector<2x32xf32>
    %84 = arith.mulf %73, %65 : vector<2x32xf32>
    %85 = arith.addf %83, %84 : vector<2x32xf32>
    %86 = math.tanh %85 : vector<2x32xf32>
    %cst_39 = arith.constant 1.000000e+00 : f32
    %87 = vector.broadcast %cst_39 : f32 to vector<2x32xf32>
    %88 = arith.subf %87, %81 : vector<2x32xf32>
    %89 = arith.mulf %88, %86 : vector<2x32xf32>
    %90 = arith.mulf %81, %61 : vector<2x32xf32>
    %91 = arith.addf %89, %90 : vector<2x32xf32>
    %cst_40 = arith.constant dense<0.000000e+00> : vector<2x32xf32>
    %92 = tpu.matmul %91, %25, %cst_40 {dimension_numbers = #tpu.dot_dimension_numbers<[1], [0], [0], [1], [0, 0, 1, 1], [], []>} : vector<2x32xf32>, vector<32x32xf32>, vector<2x32xf32> -> vector<2x32xf32>
    %cst_41 = arith.constant dense<0.000000e+00> : vector<2x32xf32>
    %93 = tpu.matmul %91, %26, %cst_41 {dimension_numbers = #tpu.dot_dimension_numbers<[1], [0], [0], [1], [0, 0, 1, 1], [], []>} : vector<2x32xf32>, vector<32x32xf32>, vector<2x32xf32> -> vector<2x32xf32>
    %cst_42 = arith.constant dense<0.000000e+00> : vector<2x32xf32>
    %94 = tpu.matmul %91, %27, %cst_42 {dimension_numbers = #tpu.dot_dimension_numbers<[1], [0], [0], [1], [0, 0, 1, 1], [], []>} : vector<2x32xf32>, vector<32x32xf32>, vector<2x32xf32> -> vector<2x32xf32>
    %95 = arith.addf %94, %30 : vector<2x32xf32>
    %96 = vector.extract_strided_slice %9 {offsets = [0, 2, 0], sizes = [2, 1, 32], strides = [1, 1, 1]} : vector<2x8x32xf32> to vector<2x1x32xf32>
    %97 = vector.shape_cast %96 : vector<2x1x32xf32> to vector<2x32xf32>
    %98 = arith.addf %97, %92 : vector<2x32xf32>
    %99 = arith.negf %98 : vector<2x32xf32>
    %100 = math.exp %99 : vector<2x32xf32>
    %cst_43 = arith.constant 1.000000e+00 : f32
    %101 = vector.broadcast %cst_43 : f32 to vector<2x32xf32>
    %102 = arith.addf %101, %100 : vector<2x32xf32>
    %103 = arith.divf %101, %102 : vector<2x32xf32>
    %104 = vector.extract_strided_slice %18 {offsets = [0, 2, 0], sizes = [2, 1, 32], strides = [1, 1, 1]} : vector<2x8x32xf32> to vector<2x1x32xf32>
    %105 = vector.shape_cast %104 : vector<2x1x32xf32> to vector<2x32xf32>
    %106 = arith.addf %105, %93 : vector<2x32xf32>
    %107 = arith.negf %106 : vector<2x32xf32>
    %108 = math.exp %107 : vector<2x32xf32>
    %cst_44 = arith.constant 1.000000e+00 : f32
    %109 = vector.broadcast %cst_44 : f32 to vector<2x32xf32>
    %110 = arith.addf %109, %108 : vector<2x32xf32>
    %111 = arith.divf %109, %110 : vector<2x32xf32>
    %112 = vector.extract_strided_slice %24 {offsets = [0, 2, 0], sizes = [2, 1, 32], strides = [1, 1, 1]} : vector<2x8x32xf32> to vector<2x1x32xf32>
    %113 = vector.shape_cast %112 : vector<2x1x32xf32> to vector<2x32xf32>
    %114 = arith.mulf %103, %95 : vector<2x32xf32>
    %115 = arith.addf %113, %114 : vector<2x32xf32>
    %116 = math.tanh %115 : vector<2x32xf32>
    %cst_45 = arith.constant 1.000000e+00 : f32
    %117 = vector.broadcast %cst_45 : f32 to vector<2x32xf32>
    %118 = arith.subf %117, %111 : vector<2x32xf32>
    %119 = arith.mulf %118, %116 : vector<2x32xf32>
    %120 = arith.mulf %111, %91 : vector<2x32xf32>
    %121 = arith.addf %119, %120 : vector<2x32xf32>
    %cst_46 = arith.constant dense<0.000000e+00> : vector<2x32xf32>
    %122 = tpu.matmul %121, %25, %cst_46 {dimension_numbers = #tpu.dot_dimension_numbers<[1], [0], [0], [1], [0, 0, 1, 1], [], []>} : vector<2x32xf32>, vector<32x32xf32>, vector<2x32xf32> -> vector<2x32xf32>
    %cst_47 = arith.constant dense<0.000000e+00> : vector<2x32xf32>
    %123 = tpu.matmul %121, %26, %cst_47 {dimension_numbers = #tpu.dot_dimension_numbers<[1], [0], [0], [1], [0, 0, 1, 1], [], []>} : vector<2x32xf32>, vector<32x32xf32>, vector<2x32xf32> -> vector<2x32xf32>
    %cst_48 = arith.constant dense<0.000000e+00> : vector<2x32xf32>
    %124 = tpu.matmul %121, %27, %cst_48 {dimension_numbers = #tpu.dot_dimension_numbers<[1], [0], [0], [1], [0, 0, 1, 1], [], []>} : vector<2x32xf32>, vector<32x32xf32>, vector<2x32xf32> -> vector<2x32xf32>
    %125 = arith.addf %124, %30 : vector<2x32xf32>
    %126 = vector.extract_strided_slice %9 {offsets = [0, 3, 0], sizes = [2, 1, 32], strides = [1, 1, 1]} : vector<2x8x32xf32> to vector<2x1x32xf32>
    %127 = vector.shape_cast %126 : vector<2x1x32xf32> to vector<2x32xf32>
    %128 = arith.addf %127, %122 : vector<2x32xf32>
    %129 = arith.negf %128 : vector<2x32xf32>
    %130 = math.exp %129 : vector<2x32xf32>
    %cst_49 = arith.constant 1.000000e+00 : f32
    %131 = vector.broadcast %cst_49 : f32 to vector<2x32xf32>
    %132 = arith.addf %131, %130 : vector<2x32xf32>
    %133 = arith.divf %131, %132 : vector<2x32xf32>
    %134 = vector.extract_strided_slice %18 {offsets = [0, 3, 0], sizes = [2, 1, 32], strides = [1, 1, 1]} : vector<2x8x32xf32> to vector<2x1x32xf32>
    %135 = vector.shape_cast %134 : vector<2x1x32xf32> to vector<2x32xf32>
    %136 = arith.addf %135, %123 : vector<2x32xf32>
    %137 = arith.negf %136 : vector<2x32xf32>
    %138 = math.exp %137 : vector<2x32xf32>
    %cst_50 = arith.constant 1.000000e+00 : f32
    %139 = vector.broadcast %cst_50 : f32 to vector<2x32xf32>
    %140 = arith.addf %139, %138 : vector<2x32xf32>
    %141 = arith.divf %139, %140 : vector<2x32xf32>
    %142 = vector.extract_strided_slice %24 {offsets = [0, 3, 0], sizes = [2, 1, 32], strides = [1, 1, 1]} : vector<2x8x32xf32> to vector<2x1x32xf32>
    %143 = vector.shape_cast %142 : vector<2x1x32xf32> to vector<2x32xf32>
    %144 = arith.mulf %133, %125 : vector<2x32xf32>
    %145 = arith.addf %143, %144 : vector<2x32xf32>
    %146 = math.tanh %145 : vector<2x32xf32>
    %cst_51 = arith.constant 1.000000e+00 : f32
    %147 = vector.broadcast %cst_51 : f32 to vector<2x32xf32>
    %148 = arith.subf %147, %141 : vector<2x32xf32>
    %149 = arith.mulf %148, %146 : vector<2x32xf32>
    %150 = arith.mulf %141, %121 : vector<2x32xf32>
    %151 = arith.addf %149, %150 : vector<2x32xf32>
    %cst_52 = arith.constant dense<0.000000e+00> : vector<2x32xf32>
    %152 = tpu.matmul %151, %25, %cst_52 {dimension_numbers = #tpu.dot_dimension_numbers<[1], [0], [0], [1], [0, 0, 1, 1], [], []>} : vector<2x32xf32>, vector<32x32xf32>, vector<2x32xf32> -> vector<2x32xf32>
    %cst_53 = arith.constant dense<0.000000e+00> : vector<2x32xf32>
    %153 = tpu.matmul %151, %26, %cst_53 {dimension_numbers = #tpu.dot_dimension_numbers<[1], [0], [0], [1], [0, 0, 1, 1], [], []>} : vector<2x32xf32>, vector<32x32xf32>, vector<2x32xf32> -> vector<2x32xf32>
    %cst_54 = arith.constant dense<0.000000e+00> : vector<2x32xf32>
    %154 = tpu.matmul %151, %27, %cst_54 {dimension_numbers = #tpu.dot_dimension_numbers<[1], [0], [0], [1], [0, 0, 1, 1], [], []>} : vector<2x32xf32>, vector<32x32xf32>, vector<2x32xf32> -> vector<2x32xf32>
    %155 = arith.addf %154, %30 : vector<2x32xf32>
    %156 = vector.extract_strided_slice %9 {offsets = [0, 4, 0], sizes = [2, 1, 32], strides = [1, 1, 1]} : vector<2x8x32xf32> to vector<2x1x32xf32>
    %157 = vector.shape_cast %156 : vector<2x1x32xf32> to vector<2x32xf32>
    %158 = arith.addf %157, %152 : vector<2x32xf32>
    %159 = arith.negf %158 : vector<2x32xf32>
    %160 = math.exp %159 : vector<2x32xf32>
    %cst_55 = arith.constant 1.000000e+00 : f32
    %161 = vector.broadcast %cst_55 : f32 to vector<2x32xf32>
    %162 = arith.addf %161, %160 : vector<2x32xf32>
    %163 = arith.divf %161, %162 : vector<2x32xf32>
    %164 = vector.extract_strided_slice %18 {offsets = [0, 4, 0], sizes = [2, 1, 32], strides = [1, 1, 1]} : vector<2x8x32xf32> to vector<2x1x32xf32>
    %165 = vector.shape_cast %164 : vector<2x1x32xf32> to vector<2x32xf32>
    %166 = arith.addf %165, %153 : vector<2x32xf32>
    %167 = arith.negf %166 : vector<2x32xf32>
    %168 = math.exp %167 : vector<2x32xf32>
    %cst_56 = arith.constant 1.000000e+00 : f32
    %169 = vector.broadcast %cst_56 : f32 to vector<2x32xf32>
    %170 = arith.addf %169, %168 : vector<2x32xf32>
    %171 = arith.divf %169, %170 : vector<2x32xf32>
    %172 = vector.extract_strided_slice %24 {offsets = [0, 4, 0], sizes = [2, 1, 32], strides = [1, 1, 1]} : vector<2x8x32xf32> to vector<2x1x32xf32>
    %173 = vector.shape_cast %172 : vector<2x1x32xf32> to vector<2x32xf32>
    %174 = arith.mulf %163, %155 : vector<2x32xf32>
    %175 = arith.addf %173, %174 : vector<2x32xf32>
    %176 = math.tanh %175 : vector<2x32xf32>
    %cst_57 = arith.constant 1.000000e+00 : f32
    %177 = vector.broadcast %cst_57 : f32 to vector<2x32xf32>
    %178 = arith.subf %177, %171 : vector<2x32xf32>
    %179 = arith.mulf %178, %176 : vector<2x32xf32>
    %180 = arith.mulf %171, %151 : vector<2x32xf32>
    %181 = arith.addf %179, %180 : vector<2x32xf32>
    %cst_58 = arith.constant dense<0.000000e+00> : vector<2x32xf32>
    %182 = tpu.matmul %181, %25, %cst_58 {dimension_numbers = #tpu.dot_dimension_numbers<[1], [0], [0], [1], [0, 0, 1, 1], [], []>} : vector<2x32xf32>, vector<32x32xf32>, vector<2x32xf32> -> vector<2x32xf32>
    %cst_59 = arith.constant dense<0.000000e+00> : vector<2x32xf32>
    %183 = tpu.matmul %181, %26, %cst_59 {dimension_numbers = #tpu.dot_dimension_numbers<[1], [0], [0], [1], [0, 0, 1, 1], [], []>} : vector<2x32xf32>, vector<32x32xf32>, vector<2x32xf32> -> vector<2x32xf32>
    %cst_60 = arith.constant dense<0.000000e+00> : vector<2x32xf32>
    %184 = tpu.matmul %181, %27, %cst_60 {dimension_numbers = #tpu.dot_dimension_numbers<[1], [0], [0], [1], [0, 0, 1, 1], [], []>} : vector<2x32xf32>, vector<32x32xf32>, vector<2x32xf32> -> vector<2x32xf32>
    %185 = arith.addf %184, %30 : vector<2x32xf32>
    %186 = vector.extract_strided_slice %9 {offsets = [0, 5, 0], sizes = [2, 1, 32], strides = [1, 1, 1]} : vector<2x8x32xf32> to vector<2x1x32xf32>
    %187 = vector.shape_cast %186 : vector<2x1x32xf32> to vector<2x32xf32>
    %188 = arith.addf %187, %182 : vector<2x32xf32>
    %189 = arith.negf %188 : vector<2x32xf32>
    %190 = math.exp %189 : vector<2x32xf32>
    %cst_61 = arith.constant 1.000000e+00 : f32
    %191 = vector.broadcast %cst_61 : f32 to vector<2x32xf32>
    %192 = arith.addf %191, %190 : vector<2x32xf32>
    %193 = arith.divf %191, %192 : vector<2x32xf32>
    %194 = vector.extract_strided_slice %18 {offsets = [0, 5, 0], sizes = [2, 1, 32], strides = [1, 1, 1]} : vector<2x8x32xf32> to vector<2x1x32xf32>
    %195 = vector.shape_cast %194 : vector<2x1x32xf32> to vector<2x32xf32>
    %196 = arith.addf %195, %183 : vector<2x32xf32>
    %197 = arith.negf %196 : vector<2x32xf32>
    %198 = math.exp %197 : vector<2x32xf32>
    %cst_62 = arith.constant 1.000000e+00 : f32
    %199 = vector.broadcast %cst_62 : f32 to vector<2x32xf32>
    %200 = arith.addf %199, %198 : vector<2x32xf32>
    %201 = arith.divf %199, %200 : vector<2x32xf32>
    %202 = vector.extract_strided_slice %24 {offsets = [0, 5, 0], sizes = [2, 1, 32], strides = [1, 1, 1]} : vector<2x8x32xf32> to vector<2x1x32xf32>
    %203 = vector.shape_cast %202 : vector<2x1x32xf32> to vector<2x32xf32>
    %204 = arith.mulf %193, %185 : vector<2x32xf32>
    %205 = arith.addf %203, %204 : vector<2x32xf32>
    %206 = math.tanh %205 : vector<2x32xf32>
    %cst_63 = arith.constant 1.000000e+00 : f32
    %207 = vector.broadcast %cst_63 : f32 to vector<2x32xf32>
    %208 = arith.subf %207, %201 : vector<2x32xf32>
    %209 = arith.mulf %208, %206 : vector<2x32xf32>
    %210 = arith.mulf %201, %181 : vector<2x32xf32>
    %211 = arith.addf %209, %210 : vector<2x32xf32>
    %cst_64 = arith.constant dense<0.000000e+00> : vector<2x32xf32>
    %212 = tpu.matmul %211, %25, %cst_64 {dimension_numbers = #tpu.dot_dimension_numbers<[1], [0], [0], [1], [0, 0, 1, 1], [], []>} : vector<2x32xf32>, vector<32x32xf32>, vector<2x32xf32> -> vector<2x32xf32>
    %cst_65 = arith.constant dense<0.000000e+00> : vector<2x32xf32>
    %213 = tpu.matmul %211, %26, %cst_65 {dimension_numbers = #tpu.dot_dimension_numbers<[1], [0], [0], [1], [0, 0, 1, 1], [], []>} : vector<2x32xf32>, vector<32x32xf32>, vector<2x32xf32> -> vector<2x32xf32>
    %cst_66 = arith.constant dense<0.000000e+00> : vector<2x32xf32>
    %214 = tpu.matmul %211, %27, %cst_66 {dimension_numbers = #tpu.dot_dimension_numbers<[1], [0], [0], [1], [0, 0, 1, 1], [], []>} : vector<2x32xf32>, vector<32x32xf32>, vector<2x32xf32> -> vector<2x32xf32>
    %215 = arith.addf %214, %30 : vector<2x32xf32>
    %216 = vector.extract_strided_slice %9 {offsets = [0, 6, 0], sizes = [2, 1, 32], strides = [1, 1, 1]} : vector<2x8x32xf32> to vector<2x1x32xf32>
    %217 = vector.shape_cast %216 : vector<2x1x32xf32> to vector<2x32xf32>
    %218 = arith.addf %217, %212 : vector<2x32xf32>
    %219 = arith.negf %218 : vector<2x32xf32>
    %220 = math.exp %219 : vector<2x32xf32>
    %cst_67 = arith.constant 1.000000e+00 : f32
    %221 = vector.broadcast %cst_67 : f32 to vector<2x32xf32>
    %222 = arith.addf %221, %220 : vector<2x32xf32>
    %223 = arith.divf %221, %222 : vector<2x32xf32>
    %224 = vector.extract_strided_slice %18 {offsets = [0, 6, 0], sizes = [2, 1, 32], strides = [1, 1, 1]} : vector<2x8x32xf32> to vector<2x1x32xf32>
    %225 = vector.shape_cast %224 : vector<2x1x32xf32> to vector<2x32xf32>
    %226 = arith.addf %225, %213 : vector<2x32xf32>
    %227 = arith.negf %226 : vector<2x32xf32>
    %228 = math.exp %227 : vector<2x32xf32>
    %cst_68 = arith.constant 1.000000e+00 : f32
    %229 = vector.broadcast %cst_68 : f32 to vector<2x32xf32>
    %230 = arith.addf %229, %228 : vector<2x32xf32>
    %231 = arith.divf %229, %230 : vector<2x32xf32>
    %232 = vector.extract_strided_slice %24 {offsets = [0, 6, 0], sizes = [2, 1, 32], strides = [1, 1, 1]} : vector<2x8x32xf32> to vector<2x1x32xf32>
    %233 = vector.shape_cast %232 : vector<2x1x32xf32> to vector<2x32xf32>
    %234 = arith.mulf %223, %215 : vector<2x32xf32>
    %235 = arith.addf %233, %234 : vector<2x32xf32>
    %236 = math.tanh %235 : vector<2x32xf32>
    %cst_69 = arith.constant 1.000000e+00 : f32
    %237 = vector.broadcast %cst_69 : f32 to vector<2x32xf32>
    %238 = arith.subf %237, %231 : vector<2x32xf32>
    %239 = arith.mulf %238, %236 : vector<2x32xf32>
    %240 = arith.mulf %231, %211 : vector<2x32xf32>
    %241 = arith.addf %239, %240 : vector<2x32xf32>
    %cst_70 = arith.constant dense<0.000000e+00> : vector<2x32xf32>
    %242 = tpu.matmul %241, %25, %cst_70 {dimension_numbers = #tpu.dot_dimension_numbers<[1], [0], [0], [1], [0, 0, 1, 1], [], []>} : vector<2x32xf32>, vector<32x32xf32>, vector<2x32xf32> -> vector<2x32xf32>
    %cst_71 = arith.constant dense<0.000000e+00> : vector<2x32xf32>
    %243 = tpu.matmul %241, %26, %cst_71 {dimension_numbers = #tpu.dot_dimension_numbers<[1], [0], [0], [1], [0, 0, 1, 1], [], []>} : vector<2x32xf32>, vector<32x32xf32>, vector<2x32xf32> -> vector<2x32xf32>
    %cst_72 = arith.constant dense<0.000000e+00> : vector<2x32xf32>
    %244 = tpu.matmul %241, %27, %cst_72 {dimension_numbers = #tpu.dot_dimension_numbers<[1], [0], [0], [1], [0, 0, 1, 1], [], []>} : vector<2x32xf32>, vector<32x32xf32>, vector<2x32xf32> -> vector<2x32xf32>
    %245 = arith.addf %244, %30 : vector<2x32xf32>
    %246 = vector.extract_strided_slice %9 {offsets = [0, 7, 0], sizes = [2, 1, 32], strides = [1, 1, 1]} : vector<2x8x32xf32> to vector<2x1x32xf32>
    %247 = vector.shape_cast %246 : vector<2x1x32xf32> to vector<2x32xf32>
    %248 = arith.addf %247, %242 : vector<2x32xf32>
    %249 = arith.negf %248 : vector<2x32xf32>
    %250 = math.exp %249 : vector<2x32xf32>
    %cst_73 = arith.constant 1.000000e+00 : f32
    %251 = vector.broadcast %cst_73 : f32 to vector<2x32xf32>
    %252 = arith.addf %251, %250 : vector<2x32xf32>
    %253 = arith.divf %251, %252 : vector<2x32xf32>
    %254 = vector.extract_strided_slice %18 {offsets = [0, 7, 0], sizes = [2, 1, 32], strides = [1, 1, 1]} : vector<2x8x32xf32> to vector<2x1x32xf32>
    %255 = vector.shape_cast %254 : vector<2x1x32xf32> to vector<2x32xf32>
    %256 = arith.addf %255, %243 : vector<2x32xf32>
    %257 = arith.negf %256 : vector<2x32xf32>
    %258 = math.exp %257 : vector<2x32xf32>
    %cst_74 = arith.constant 1.000000e+00 : f32
    %259 = vector.broadcast %cst_74 : f32 to vector<2x32xf32>
    %260 = arith.addf %259, %258 : vector<2x32xf32>
    %261 = arith.divf %259, %260 : vector<2x32xf32>
    %262 = vector.extract_strided_slice %24 {offsets = [0, 7, 0], sizes = [2, 1, 32], strides = [1, 1, 1]} : vector<2x8x32xf32> to vector<2x1x32xf32>
    %263 = vector.shape_cast %262 : vector<2x1x32xf32> to vector<2x32xf32>
    %264 = arith.mulf %253, %245 : vector<2x32xf32>
    %265 = arith.addf %263, %264 : vector<2x32xf32>
    %266 = math.tanh %265 : vector<2x32xf32>
    %cst_75 = arith.constant 1.000000e+00 : f32
    %267 = vector.broadcast %cst_75 : f32 to vector<2x32xf32>
    %268 = arith.subf %267, %261 : vector<2x32xf32>
    %269 = arith.mulf %268, %266 : vector<2x32xf32>
    %270 = arith.mulf %261, %241 : vector<2x32xf32>
    %271 = arith.addf %269, %270 : vector<2x32xf32>
    %c0_76 = arith.constant 0 : index
    %c0_77 = arith.constant 0 : index
    %272 = vector.load %arg13[%c0_76, %c0_77] : memref<32x4xf32, #tpu.memory_space<vmem>>, vector<32x4xf32>
    %cst_78 = arith.constant dense<0.000000e+00> : vector<2x4xf32>
    %273 = tpu.matmul %271, %272, %cst_78 {dimension_numbers = #tpu.dot_dimension_numbers<[1], [0], [0], [1], [0, 0, 1, 1], [], []>} : vector<2x32xf32>, vector<32x4xf32>, vector<2x4xf32> -> vector<2x4xf32>
    %c0_79 = arith.constant 0 : index
    %c0_80 = arith.constant 0 : index
    %274 = vector.load %arg14[%c0_79, %c0_80] : memref<1x4xf32, #tpu.memory_space<vmem>>, vector<1x4xf32>
    %275 = vector.broadcast %274 : vector<1x4xf32> to vector<2x4xf32>
    %276 = arith.addf %273, %275 : vector<2x4xf32>
    %c0_81 = arith.constant 0 : index
    %c0_82 = arith.constant 0 : index
    %277 = vector.load %arg15[%c0_81, %c0_82] : memref<2x4xf32, #tpu.memory_space<vmem>>, vector<2x4xf32>
    tpu.vector_store %arg15[%c0_81, %c0_82], %276 {strides = array<i32>} : memref<2x4xf32, #tpu.memory_space<vmem>>, vector<2x4xf32>,
    return
  }
}

</mosaic_0001>

<llo_original>
// kernel: gru_model_forward.1
$region0: #{gru_model_forward.1}
  #allocation0 [shape = 'u32[]', space=smem, size = 0x4, offset = 0x4, fixed_abs, tag = 'smem constant byte address 0x4 - core index']
  #allocation1 [shape = 'u32[144,128]{1,0:T(1,128)}', space=vmem, size = 0x12000, scoped, tag = 'internal scratch']
  %s0 = inlined_call_operand.vmem [shape: f32[16,16], index: 0, kind: input, shape index: {}]
  %s1 = inlined_call_operand.vmem [shape: f32[16,32], index: 1, kind: input, shape index: {}]
  %s2 = inlined_call_operand.vmem [shape: f32[16,32], index: 2, kind: input, shape index: {}]
  %s3 = inlined_call_operand.vmem [shape: f32[16,32], index: 3, kind: input, shape index: {}]
  %s4 = inlined_call_operand.vmem [shape: f32[32,32], index: 4, kind: input, shape index: {}]
  %s5 = inlined_call_operand.vmem [shape: f32[32,32], index: 5, kind: input, shape index: {}]
  %s6 = inlined_call_operand.vmem [shape: f32[32,32], index: 6, kind: input, shape index: {}]
  %s7 = inlined_call_operand.vmem [shape: f32[1,32], index: 7, kind: input, shape index: {}]
  %s8 = inlined_call_operand.vmem [shape: f32[1,32], index: 8, kind: input, shape index: {}]
  %s9 = inlined_call_operand.vmem [shape: f32[1,32], index: 9, kind: input, shape index: {}]
  %s10 = inlined_call_operand.vmem [shape: f32[1,32], index: 10, kind: input, shape index: {}]
  %s11 = inlined_call_operand.vmem [shape: f32[1,32], index: 11, kind: input, shape index: {}]
  %s12 = inlined_call_operand.vmem [shape: f32[1,32], index: 12, kind: input, shape index: {}]
  %s13 = inlined_call_operand.vmem [shape: f32[32,4], index: 13, kind: input, shape index: {}]
  %s14 = inlined_call_operand.vmem [shape: f32[1,4], index: 14, kind: input, shape index: {}]
  %s15 = inlined_call_operand.hbm [shape: f32[2,4], index: 15, kind: output, shape index: {}]
  %s16 = sld [smem:[#allocation0]]
  $region70: #{gru_model_forward.1} parent=0
    _
  %s18 = ssub.s32 1, %s16
  %s19 = scalar_select 0, %s18, %s16
  $region1: #{gru_model_forward.1} parent=0
    #allocation2 [shape = 'u8[1024]{0}', space=vmem, size = 0x400, scoped, tag = 'output window, operand 0, single buffered']
    #allocation3 [shape = 's32[1]{0}', space=sflag, size = 0x4, scoped, tag = 'scoped memory for gru_model_forward.1']
    %20 = vsyncpa [#allocation3], 0
    // Predicated region
    $region2: #{gru_model_forward.1} parent=1 // pred_check
      _
    $region3: #{gru_model_forward.1} parent=1 // pred_check_branch
      %22 = sbr.rel (0) target = $region5
    $region4: #{gru_model_forward.1} parent=1 // pred_region
      _
    $region5: #{gru_model_forward.1} parent=1 // pred_fallthru
      _
    // Predicated region
    $region6: #{gru_model_forward.1} parent=1 // pred_check
      _
    $region7: #{gru_model_forward.1} parent=1 // pred_check_branch
      %24 = sbr.rel (0) target = $region9
    $region8: #{gru_model_forward.1} parent=1 // pred_region
      _
    $region9: #{gru_model_forward.1} parent=1 // pred_fallthru
      _
    // Predicated region
    $region10: #{gru_model_forward.1} parent=1 // pred_check
      _
    $region11: #{gru_model_forward.1} parent=1 // pred_check_branch
      %26 = sbr.rel (0) target = $region13
    $region12: #{gru_model_forward.1} parent=1 // pred_region
      _
    $region13: #{gru_model_forward.1} parent=1 // pred_fallthru
      _
    // Predicated region
    $region14: #{gru_model_forward.1} parent=1 // pred_check
      _
    $region15: #{gru_model_forward.1} parent=1 // pred_check_branch
      %28 = sbr.rel (0) target = $region17
    $region16: #{gru_model_forward.1} parent=1 // pred_region
      _
    $region17: #{gru_model_forward.1} parent=1 // pred_fallthru
      _
    // Predicated region
    $region18: #{gru_model_forward.1} parent=1 // pred_check
      _
    $region19: #{gru_model_forward.1} parent=1 // pred_check_branch
      %30 = sbr.rel (0) target = $region21
    $region20: #{gru_model_forward.1} parent=1 // pred_region
      _
    $region21: #{gru_model_forward.1} parent=1 // pred_fallthru
      _
    // Predicated region
    $region22: #{gru_model_forward.1} parent=1 // pred_check
      _
    $region23: #{gru_model_forward.1} parent=1 // pred_check_branch
      %32 = sbr.rel (0) target = $region25
    $region24: #{gru_model_forward.1} parent=1 // pred_region
      _
    $region25: #{gru_model_forward.1} parent=1 // pred_fallthru
      _
    // Predicated region
    $region26: #{gru_model_forward.1} parent=1 // pred_check
      _
    $region27: #{gru_model_forward.1} parent=1 // pred_check_branch
      %34 = sbr.rel (0) target = $region29
    $region28: #{gru_model_forward.1} parent=1 // pred_region
      _
    $region29: #{gru_model_forward.1} parent=1 // pred_fallthru
      _
    // Predicated region
    $region30: #{gru_model_forward.1} parent=1 // pred_check
      _
    $region31: #{gru_model_forward.1} parent=1 // pred_check_branch
      %36 = sbr.rel (0) target = $region33
    $region32: #{gru_model_forward.1} parent=1 // pred_region
      _
    $region33: #{gru_model_forward.1} parent=1 // pred_fallthru
      _
    // Predicated region
    $region34: #{gru_model_forward.1} parent=1 // pred_check
      _
    $region35: #{gru_model_forward.1} parent=1 // pred_check_branch
      %38 = sbr.rel (0) target = $region37
    $region36: #{gru_model_forward.1} parent=1 // pred_region
      _
    $region37: #{gru_model_forward.1} parent=1 // pred_fallthru
      _
    // Predicated region
    $region38: #{gru_model_forward.1} parent=1 // pred_check
      _
    $region39: #{gru_model_forward.1} parent=1 // pred_check_branch
      %40 = sbr.rel (0) target = $region41
    $region40: #{gru_model_forward.1} parent=1 // pred_region
      _
    $region41: #{gru_model_forward.1} parent=1 // pred_fallthru
      _
    // Predicated region
    $region42: #{gru_model_forward.1} parent=1 // pred_check
      _
    $region43: #{gru_model_forward.1} parent=1 // pred_check_branch
      %42 = sbr.rel (0) target = $region45
    $region44: #{gru_model_forward.1} parent=1 // pred_region
      _
    $region45: #{gru_model_forward.1} parent=1 // pred_fallthru
      _
    // Predicated region
    $region46: #{gru_model_forward.1} parent=1 // pred_check
      _
    $region47: #{gru_model_forward.1} parent=1 // pred_check_branch
      %44 = sbr.rel (0) target = $region49
    $region48: #{gru_model_forward.1} parent=1 // pred_region
      _
    $region49: #{gru_model_forward.1} parent=1 // pred_fallthru
      _
    // Predicated region
    $region50: #{gru_model_forward.1} parent=1 // pred_check
      _
    $region51: #{gru_model_forward.1} parent=1 // pred_check_branch
      %46 = sbr.rel (0) target = $region53
    $region52: #{gru_model_forward.1} parent=1 // pred_region
      _
    $region53: #{gru_model_forward.1} parent=1 // pred_fallthru
      _
    // Predicated region
    $region54: #{gru_model_forward.1} parent=1 // pred_check
      _
    $region55: #{gru_model_forward.1} parent=1 // pred_check_branch
      %48 = sbr.rel (0) target = $region57
    $region56: #{gru_model_forward.1} parent=1 // pred_region
      _
    $region57: #{gru_model_forward.1} parent=1 // pred_fallthru
      _
    // Predicated region
    $region58: #{gru_model_forward.1} parent=1 // pred_check
      _
    $region59: #{gru_model_forward.1} parent=1 // pred_check_branch
      %50 = sbr.rel (0) target = $region61
    $region60: #{gru_model_forward.1} parent=1 // pred_region
      _
    $region61: #{gru_model_forward.1} parent=1 // pred_fallthru
      _
    %v51 = vld [vmem:[%s0] sm:$0xff]
    %v52 = vld [vmem:[%s0 + $0x8] sm:$0xff]
    %v53 = vld [vmem:[%s1] sm:$0xff]
    %v54 = vld [vmem:[%s1 + $0x8] sm:$0xff]
    %v55 = vld [vmem:[%s7] sm:$0x1]
    %v57 = vlaneseq
    %v58 = vshrl.u32 %v57, 7
    %v59 = vsub.s32 0, %v58
    %v60 = vrot.slane %v55, %v59
    %vm62 = vcmask 130048
    %v64 = vsel %vm62, %v51, 0
    %v67 = vsel %vm62, %v52, 0
    %69 = vmatprep.subr.mxu0 0.0
    %70 = vmatpush1.msra.mxu0 %v53
    %71 = vmatprep.subr.mxu0 0.0
    %72 = vmatpush1.msra.mxu0 %v54
    %73 = vmatprep.subr.mxu0 0.0
    %74 = vmatpush1.msra.mxu0 0.0
    %75 = vmatprep.subr.mxu0 0.0
    %76 = vmatpush1.msra.mxu0 0.0
    %77 = vmatprep.subr.mxu0 0.0
    %78 = vmatpush1.msra.mxu0 0.0
    %79 = vmatprep.subr.mxu0 0.0
    %80 = vmatpush1.msra.mxu0 0.0
    %81 = vmatprep.subr.mxu0 0.0
    %82 = vmatpush1.msra.mxu0 0.0
    %83 = vmatprep.subr.mxu0 0.0
    %84 = vmatpush1.msra.mxu0 0.0
    %85 = vmatprep.subr.mxu0 0.0
    %86 = vmatpush1.msra.mxu0 0.0
    %87 = vmatprep.subr.mxu0 0.0
    %88 = vmatpush1.msra.mxu0 0.0
    %89 = vmatprep.subr.mxu0 0.0
    %90 = vmatpush1.msra.mxu0 0.0
    %91 = vmatprep.subr.mxu0 0.0
    %92 = vmatpush1.msra.mxu0 0.0
    %93 = vmatprep.subr.mxu0 0.0
    %94 = vmatpush1.msra.mxu0 0.0
    %95 = vmatprep.subr.mxu0 0.0
    %96 = vmatpush1.msra.mxu0 0.0
    %97 = vmatprep.subr.mxu0 0.0
    %98 = vmatpush1.msra.mxu0 0.0
    %99 = vmatprep.subr.mxu0 0.0
    %100 = vmatpush1.msra.mxu0 0.0
    %101 = vmatprep.subr.mxu0 0.0
    %102 = vmatpush1.msra.mxu0 0.0
    %103 = vmatprep.subr.mxu0 0.0
    %104 = vmatpush1.msra.mxu0 0.0
    %105 = vmatprep.subr.mxu0 0.0
    %106 = vmatpush1.msra.mxu0 0.0
    %107 = vmatprep.subr.mxu0 0.0
    %108 = vmatpush1.msra.mxu0 0.0
    %109 = vmatprep.subr.mxu0 0.0
    %110 = vmatpush1.msra.mxu0 0.0
    %111 = vmatprep.subr.mxu0 0.0
    %112 = vmatpush1.msra.mxu0 0.0
    %113 = vmatprep.subr.mxu0 0.0
    %114 = vmatpush1.msra.mxu0 0.0
    %115 = vmatprep.subr.mxu0 0.0
    %116 = vmatpush1.msra.mxu0 0.0
    %117 = vmatprep.subr.mxu0 0.0
    %118 = vmatpush1.msra.mxu0 0.0
    %119 = vmatprep.subr.mxu0 0.0
    %120 = vmatpush1.msra.mxu0 0.0
    %121 = vmatprep.subr.mxu0 0.0
    %122 = vmatpush1.msra.mxu0 0.0
    %123 = vmatprep.subr.mxu0 0.0
    %124 = vmatpush1.msra.mxu0 0.0
    %125 = vmatprep.subr.mxu0 0.0
    %126 = vmatpush1.msra.mxu0 0.0
    %127 = vmatprep.subr.mxu0 0.0
    %128 = vmatpush1.msra.mxu0 0.0
    %129 = vmatprep.subr.mxu0 0.0
    %130 = vmatpush1.msra.mxu0 0.0
    %131 = vmatprep.subr.mxu0 0.0
    %132 = vmatpush1.msra.mxu0 0.0
    %133 = vmatprep.mubr.f32.mxu0 0.0
    %134 = vmatmul.mubr.f32.gmra.mrb[0].mxu0 %v64
    %v135 = vpop.f32.mrb[0].mxu0
    %v136 = vadd.f32 %v60, %v135
    %v137 = vpop.f32.mrb[0].mxu0
    %138 = vmatprep.mubr.f32.mxu0 0.0
    %139 = vmatmul.mubr.f32.gmra.mrb[0].mxu0 %v67
    %v140 = vpop.f32.mrb[0].mxu0
    %v141 = vadd.f32 %v60, %v140
    %v142 = vpop.f32.mrb[0].mxu0
    %143 = vdwg.mxu0
    %v144 = vld [vmem:[%s10] sm:$0x1]
    %v146 = vlaneseq
    %v147 = vshrl.u32 %v146, 7
    %v148 = vsub.s32 0, %v147
    %v149 = vrot.slane %v144, %v148
    %v151 = vadd.f32 %v136, %v149
    %v152 = vadd.f32 %v141, %v149
    %v153 = vld [vmem:[%s2] sm:$0xff]
    %v154 = vld [vmem:[%s2 + $0x8] sm:$0xff]
    %v155 = vld [vmem:[%s8] sm:$0x1]
    %v157 = vlaneseq
    %v158 = vshrl.u32 %v157, 7
    %v159 = vsub.s32 0, %v158
    %v160 = vrot.slane %v155, %v159
    %162 = vmatprep.subr.mxu0 0.0
    %163 = vmatpush1.msra.mxu0 %v153
    %164 = vmatprep.subr.mxu0 0.0
    %165 = vmatpush1.msra.mxu0 %v154
    %166 = vmatprep.subr.mxu0 0.0
    %167 = vmatpush1.msra.mxu0 0.0
    %168 = vmatprep.subr.mxu0 0.0
    %169 = vmatpush1.msra.mxu0 0.0
    %170 = vmatprep.subr.mxu0 0.0
    %171 = vmatpush1.msra.mxu0 0.0
    %172 = vmatprep.subr.mxu0 0.0
    %173 = vmatpush1.msra.mxu0 0.0
    %174 = vmatprep.subr.mxu0 0.0
    %175 = vmatpush1.msra.mxu0 0.0
    %176 = vmatprep.subr.mxu0 0.0
    %177 = vmatpush1.msra.mxu0 0.0
    %178 = vmatprep.subr.mxu0 0.0
    %179 = vmatpush1.msra.mxu0 0.0
    %180 = vmatprep.subr.mxu0 0.0
    %181 = vmatpush1.msra.mxu0 0.0
    %182 = vmatprep.subr.mxu0 0.0
    %183 = vmatpush1.msra.mxu0 0.0
    %184 = vmatprep.subr.mxu0 0.0
    %185 = vmatpush1.msra.mxu0 0.0
    %186 = vmatprep.subr.mxu0 0.0
    %187 = vmatpush1.msra.mxu0 0.0
    %188 = vmatprep.subr.mxu0 0.0
    %189 = vmatpush1.msra.mxu0 0.0
    %190 = vmatprep.subr.mxu0 0.0
    %191 = vmatpush1.msra.mxu0 0.0
    %192 = vmatprep.subr.mxu0 0.0
    %193 = vmatpush1.msra.mxu0 0.0
    %194 = vmatprep.subr.mxu0 0.0
    %195 = vmatpush1.msra.mxu0 0.0
    %196 = vmatprep.subr.mxu0 0.0
    %197 = vmatpush1.msra.mxu0 0.0
    %198 = vmatprep.subr.mxu0 0.0
    %199 = vmatpush1.msra.mxu0 0.0
    %200 = vmatprep.subr.mxu0 0.0
    %201 = vmatpush1.msra.mxu0 0.0
    %202 = vmatprep.subr.mxu0 0.0
    %203 = vmatpush1.msra.mxu0 0.0
    %204 = vmatprep.subr.mxu0 0.0
    %205 = vmatpush1.msra.mxu0 0.0
    %206 = vmatprep.subr.mxu0 0.0
    %207 = vmatpush1.msra.mxu0 0.0
    %208 = vmatprep.subr.mxu0 0.0
    %209 = vmatpush1.msra.mxu0 0.0
    %210 = vmatprep.subr.mxu0 0.0
    %211 = vmatpush1.msra.mxu0 0.0
    %212 = vmatprep.subr.mxu0 0.0
    %213 = vmatpush1.msra.mxu0 0.0
    %214 = vmatprep.subr.mxu0 0.0
    %215 = vmatpush1.msra.mxu0 0.0
    %216 = vmatprep.subr.mxu0 0.0
    %217 = vmatpush1.msra.mxu0 0.0
    %218 = vmatprep.subr.mxu0 0.0
    %219 = vmatpush1.msra.mxu0 0.0
    %220 = vmatprep.subr.mxu0 0.0
    %221 = vmatpush1.msra.mxu0 0.0
    %222 = vmatprep.subr.mxu0 0.0
    %223 = vmatpush1.msra.mxu0 0.0
    %224 = vmatprep.subr.mxu0 0.0
    %225 = vmatpush1.msra.mxu0 0.0
    %226 = vmatprep.mubr.f32.mxu0 0.0
    %227 = vmatmul.mubr.f32.gmra.mrb[0].mxu0 %v64
    %v228 = vpop.f32.mrb[0].mxu0
    %v229 = vadd.f32 %v160, %v228
    %v230 = vpop.f32.mrb[0].mxu0
    %231 = vmatprep.mubr.f32.mxu0 0.0
    %232 = vmatmul.mubr.f32.gmra.mrb[0].mxu0 %v67
    %v233 = vpop.f32.mrb[0].mxu0
    %v234 = vadd.f32 %v160, %v233
    %v235 = vpop.f32.mrb[0].mxu0
    %236 = vdwg.mxu0
    %v237 = vld [vmem:[%s11] sm:$0x1]
    %v239 = vlaneseq
    %v240 = vshrl.u32 %v239, 7
    %v241 = vsub.s32 0, %v240
    %v242 = vrot.slane %v237, %v241
    %v244 = vadd.f32 %v229, %v242
    %v245 = vadd.f32 %v234, %v242
    %v246 = vld [vmem:[%s3] sm:$0xff]
    %v247 = vld [vmem:[%s3 + $0x8] sm:$0xff]
    %v248 = vld [vmem:[%s9] sm:$0x1]
    %v250 = vlaneseq
    %v251 = vshrl.u32 %v250, 7
    %v252 = vsub.s32 0, %v251
    %v253 = vrot.slane %v248, %v252
    %255 = vmatprep.subr.mxu0 0.0
    %256 = vmatpush1.msra.mxu0 %v246
    %257 = vmatprep.subr.mxu0 0.0
    %258 = vmatpush1.msra.mxu0 %v247
    %259 = vmatprep.subr.mxu0 0.0
    %260 = vmatpush1.msra.mxu0 0.0
    %261 = vmatprep.subr.mxu0 0.0
    %262 = vmatpush1.msra.mxu0 0.0
    %263 = vmatprep.subr.mxu0 0.0
    %264 = vmatpush1.msra.mxu0 0.0
    %265 = vmatprep.subr.mxu0 0.0
    %266 = vmatpush1.msra.mxu0 0.0
    %267 = vmatprep.subr.mxu0 0.0
    %268 = vmatpush1.msra.mxu0 0.0
    %269 = vmatprep.subr.mxu0 0.0
    %270 = vmatpush1.msra.mxu0 0.0
    %271 = vmatprep.subr.mxu0 0.0
    %272 = vmatpush1.msra.mxu0 0.0
    %273 = vmatprep.subr.mxu0 0.0
    %274 = vmatpush1.msra.mxu0 0.0
    %275 = vmatprep.subr.mxu0 0.0
    %276 = vmatpush1.msra.mxu0 0.0
    %277 = vmatprep.subr.mxu0 0.0
    %278 = vmatpush1.msra.mxu0 0.0
    %279 = vmatprep.subr.mxu0 0.0
    %280 = vmatpush1.msra.mxu0 0.0
    %281 = vmatprep.subr.mxu0 0.0
    %282 = vmatpush1.msra.mxu0 0.0
    %283 = vmatprep.subr.mxu0 0.0
    %284 = vmatpush1.msra.mxu0 0.0
    %285 = vmatprep.subr.mxu0 0.0
    %286 = vmatpush1.msra.mxu0 0.0
    %287 = vmatprep.subr.mxu0 0.0
    %288 = vmatpush1.msra.mxu0 0.0
    %289 = vmatprep.subr.mxu0 0.0
    %290 = vmatpush1.msra.mxu0 0.0
    %291 = vmatprep.subr.mxu0 0.0
    %292 = vmatpush1.msra.mxu0 0.0
    %293 = vmatprep.subr.mxu0 0.0
    %294 = vmatpush1.msra.mxu0 0.0
    %295 = vmatprep.subr.mxu0 0.0
    %296 = vmatpush1.msra.mxu0 0.0
    %297 = vmatprep.subr.mxu0 0.0
    %298 = vmatpush1.msra.mxu0 0.0
    %299 = vmatprep.subr.mxu0 0.0
    %300 = vmatpush1.msra.mxu0 0.0
    %301 = vmatprep.subr.mxu0 0.0
    %302 = vmatpush1.msra.mxu0 0.0
    %303 = vmatprep.subr.mxu0 0.0
    %304 = vmatpush1.msra.mxu0 0.0
    %305 = vmatprep.subr.mxu0 0.0
    %306 = vmatpush1.msra.mxu0 0.0
    %307 = vmatprep.subr.mxu0 0.0
    %308 = vmatpush1.msra.mxu0 0.0
    %309 = vmatprep.subr.mxu0 0.0
    %310 = vmatpush1.msra.mxu0 0.0
    %311 = vmatprep.subr.mxu0 0.0
    %312 = vmatpush1.msra.mxu0 0.0
    %313 = vmatprep.subr.mxu0 0.0
    %314 = vmatpush1.msra.mxu0 0.0
    %315 = vmatprep.subr.mxu0 0.0
    %316 = vmatpush1.msra.mxu0 0.0
    %317 = vmatprep.subr.mxu0 0.0
    %318 = vmatpush1.msra.mxu0 0.0
    %319 = vmatprep.mubr.f32.mxu0 0.0
    %320 = vmatmul.mubr.f32.gmra.mrb[0].mxu0 %v64
    %v321 = vpop.f32.mrb[0].mxu0
    %v322 = vadd.f32 %v253, %v321
    %v323 = vpop.f32.mrb[0].mxu0
    %324 = vmatprep.mubr.f32.mxu0 0.0
    %325 = vmatmul.mubr.f32.gmra.mrb[0].mxu0 %v67
    %v326 = vpop.f32.mrb[0].mxu0
    %v327 = vadd.f32 %v253, %v326
    %v328 = vpop.f32.mrb[0].mxu0
    %329 = vdwg.mxu0
    %v330 = vld [vmem:[%s4] sm:$0xff]
    %v331 = vld [vmem:[%s4 + $0x8] sm:$0xff]
    %v332 = vld [vmem:[%s4 + $0x10] sm:$0xff]
    %v333 = vld [vmem:[%s4 + $0x18] sm:$0xff]
    %v334 = vld [vmem:[%s5] sm:$0xff]
    %v335 = vld [vmem:[%s5 + $0x8] sm:$0xff]
    %v336 = vld [vmem:[%s5 + $0x10] sm:$0xff]
    %v337 = vld [vmem:[%s5 + $0x18] sm:$0xff]
    %v338 = vld [vmem:[%s6] sm:$0xff]
    %v339 = vld [vmem:[%s6 + $0x8] sm:$0xff]
    %v340 = vld [vmem:[%s6 + $0x10] sm:$0xff]
    %v341 = vld [vmem:[%s6 + $0x18] sm:$0xff]
    %v342 = vld [vmem:[%s12] sm:$0x1]
    %v344 = vlaneseq
    %v345 = vshrl.u32 %v344, 7
    %v346 = vsub.s32 0, %v345
    %v347 = vrot.slane %v342, %v346
    %vm349 = vcmask 261120
    %v351 = vsel %vm349, 0.0, 0
    %353 = vmatprep.subr.mxu0 0.0
    %354 = vmatpush1.msra.mxu0 %v330
    %355 = vmatprep.subr.mxu0 0.0
    %356 = vmatpush1.msra.mxu0 %v331
    %357 = vmatprep.subr.mxu0 0.0
    %358 = vmatpush1.msra.mxu0 %v332
    %359 = vmatprep.subr.mxu0 0.0
    %360 = vmatpush1.msra.mxu0 %v333
    %361 = vmatprep.subr.mxu0 0.0
    %362 = vmatpush1.msra.mxu0 0.0
    %363 = vmatprep.subr.mxu0 0.0
    %364 = vmatpush1.msra.mxu0 0.0
    %365 = vmatprep.subr.mxu0 0.0
    %366 = vmatpush1.msra.mxu0 0.0
    %367 = vmatprep.subr.mxu0 0.0
    %368 = vmatpush1.msra.mxu0 0.0
    %369 = vmatprep.subr.mxu0 0.0
    %370 = vmatpush1.msra.mxu0 0.0
    %371 = vmatprep.subr.mxu0 0.0
    %372 = vmatpush1.msra.mxu0 0.0
    %373 = vmatprep.subr.mxu0 0.0
    %374 = vmatpush1.msra.mxu0 0.0
    %375 = vmatprep.subr.mxu0 0.0
    %376 = vmatpush1.msra.mxu0 0.0
    %377 = vmatprep.subr.mxu0 0.0
    %378 = vmatpush1.msra.mxu0 0.0
    %379 = vmatprep.subr.mxu0 0.0
    %380 = vmatpush1.msra.mxu0 0.0
    %381 = vmatprep.subr.mxu0 0.0
    %382 = vmatpush1.msra.mxu0 0.0
    %383 = vmatprep.subr.mxu0 0.0
    %384 = vmatpush1.msra.mxu0 0.0
    %385 = vmatprep.subr.mxu0 0.0
    %386 = vmatpush1.msra.mxu0 0.0
    %387 = vmatprep.subr.mxu0 0.0
    %388 = vmatpush1.msra.mxu0 0.0
    %389 = vmatprep.subr.mxu0 0.0
    %390 = vmatpush1.msra.mxu0 0.0
    %391 = vmatprep.subr.mxu0 0.0
    %392 = vmatpush1.msra.mxu0 0.0
    %393 = vmatprep.subr.mxu0 0.0
    %394 = vmatpush1.msra.mxu0 0.0
    %395 = vmatprep.subr.mxu0 0.0
    %396 = vmatpush1.msra.mxu0 0.0
    %397 = vmatprep.subr.mxu0 0.0
    %398 = vmatpush1.msra.mxu0 0.0
    %399 = vmatprep.subr.mxu0 0.0
    %400 = vmatpush1.msra.mxu0 0.0
    %401 = vmatprep.subr.mxu0 0.0
    %402 = vmatpush1.msra.mxu0 0.0
    %403 = vmatprep.subr.mxu0 0.0
    %404 = vmatpush1.msra.mxu0 0.0
    %405 = vmatprep.subr.mxu0 0.0
    %406 = vmatpush1.msra.mxu0 0.0
    %407 = vmatprep.subr.mxu0 0.0
    %408 = vmatpush1.msra.mxu0 0.0
    %409 = vmatprep.subr.mxu0 0.0
    %410 = vmatpush1.msra.mxu0 0.0
    %411 = vmatprep.subr.mxu0 0.0
    %412 = vmatpush1.msra.mxu0 0.0
    %413 = vmatprep.subr.mxu0 0.0
    %414 = vmatpush1.msra.mxu0 0.0
    %415 = vmatprep.subr.mxu0 0.0
    %416 = vmatpush1.msra.mxu0 0.0
    %417 = vmatprep.mubr.f32.mxu0 0.0
    %418 = vmatmul.mubr.f32.gmra.mrb[0].mxu0 %v351
    %v419 = vpop.f32.mrb[0].mxu0
    %v420 = vadd.f32 0.0, %v419
    %v421 = vpop.f32.mrb[0].mxu0
    %422 = vdwg.mxu0
    %423 = vmatprep.subr.mxu0 0.0
    %424 = vmatpush1.msra.mxu0 %v334
    %425 = vmatprep.subr.mxu0 0.0
    %426 = vmatpush1.msra.mxu0 %v335
    %427 = vmatprep.subr.mxu0 0.0
    %428 = vmatpush1.msra.mxu0 %v336
    %429 = vmatprep.subr.mxu0 0.0
    %430 = vmatpush1.msra.mxu0 %v337
    %431 = vmatprep.subr.mxu0 0.0
    %432 = vmatpush1.msra.mxu0 0.0
    %433 = vmatprep.subr.mxu0 0.0
    %434 = vmatpush1.msra.mxu0 0.0
    %435 = vmatprep.subr.mxu0 0.0
    %436 = vmatpush1.msra.mxu0 0.0
    %437 = vmatprep.subr.mxu0 0.0
    %438 = vmatpush1.msra.mxu0 0.0
    %439 = vmatprep.subr.mxu0 0.0
    %440 = vmatpush1.msra.mxu0 0.0
    %441 = vmatprep.subr.mxu0 0.0
    %442 = vmatpush1.msra.mxu0 0.0
    %443 = vmatprep.subr.mxu0 0.0
    %444 = vmatpush1.msra.mxu0 0.0
    %445 = vmatprep.subr.mxu0 0.0
    %446 = vmatpush1.msra.mxu0 0.0
    %447 = vmatprep.subr.mxu0 0.0
    %448 = vmatpush1.msra.mxu0 0.0
    %449 = vmatprep.subr.mxu0 0.0
    %450 = vmatpush1.msra.mxu0 0.0
    %451 = vmatprep.subr.mxu0 0.0
    %452 = vmatpush1.msra.mxu0 0.0
    %453 = vmatprep.subr.mxu0 0.0
    %454 = vmatpush1.msra.mxu0 0.0
    %455 = vmatprep.subr.mxu0 0.0
    %456 = vmatpush1.msra.mxu0 0.0
    %457 = vmatprep.subr.mxu0 0.0
    %458 = vmatpush1.msra.mxu0 0.0
    %459 = vmatprep.subr.mxu0 0.0
    %460 = vmatpush1.msra.mxu0 0.0
    %461 = vmatprep.subr.mxu0 0.0
    %462 = vmatpush1.msra.mxu0 0.0
    %463 = vmatprep.subr.mxu0 0.0
    %464 = vmatpush1.msra.mxu0 0.0
    %465 = vmatprep.subr.mxu0 0.0
    %466 = vmatpush1.msra.mxu0 0.0
    %467 = vmatprep.subr.mxu0 0.0
    %468 = vmatpush1.msra.mxu0 0.0
    %469 = vmatprep.subr.mxu0 0.0
    %470 = vmatpush1.msra.mxu0 0.0
    %471 = vmatprep.subr.mxu0 0.0
    %472 = vmatpush1.msra.mxu0 0.0
    %473 = vmatprep.subr.mxu0 0.0
    %474 = vmatpush1.msra.mxu0 0.0
    %475 = vmatprep.subr.mxu0 0.0
    %476 = vmatpush1.msra.mxu0 0.0
    %477 = vmatprep.subr.mxu0 0.0
    %478 = vmatpush1.msra.mxu0 0.0
    %479 = vmatprep.subr.mxu0 0.0
    %480 = vmatpush1.msra.mxu0 0.0
    %481 = vmatprep.subr.mxu0 0.0
    %482 = vmatpush1.msra.mxu0 0.0
    %483 = vmatprep.subr.mxu0 0.0
    %484 = vmatpush1.msra.mxu0 0.0
    %485 = vmatprep.subr.mxu0 0.0
    %486 = vmatpush1.msra.mxu0 0.0
    %487 = vmatprep.mubr.f32.mxu0 0.0
    %488 = vmatmul.mubr.f32.gmra.mrb[0].mxu0 %v351
    %v489 = vpop.f32.mrb[0].mxu0
    %v490 = vadd.f32 0.0, %v489
    %v491 = vpop.f32.mrb[0].mxu0
    %492 = vdwg.mxu0
    %493 = vmatprep.subr.mxu0 0.0
    %494 = vmatpush1.msra.mxu0 %v338
    %495 = vmatprep.subr.mxu0 0.0
    %496 = vmatpush1.msra.mxu0 %v339
    %497 = vmatprep.subr.mxu0 0.0
    %498 = vmatpush1.msra.mxu0 %v340
    %499 = vmatprep.subr.mxu0 0.0
    %500 = vmatpush1.msra.mxu0 %v341
    %501 = vmatprep.subr.mxu0 0.0
    %502 = vmatpush1.msra.mxu0 0.0
    %503 = vmatprep.subr.mxu0 0.0
    %504 = vmatpush1.msra.mxu0 0.0
    %505 = vmatprep.subr.mxu0 0.0
    %506 = vmatpush1.msra.mxu0 0.0
    %507 = vmatprep.subr.mxu0 0.0
    %508 = vmatpush1.msra.mxu0 0.0
    %509 = vmatprep.subr.mxu0 0.0
    %510 = vmatpush1.msra.mxu0 0.0
    %511 = vmatprep.subr.mxu0 0.0
    %512 = vmatpush1.msra.mxu0 0.0
    %513 = vmatprep.subr.mxu0 0.0
    %514 = vmatpush1.msra.mxu0 0.0
    %515 = vmatprep.subr.mxu0 0.0
    %516 = vmatpush1.msra.mxu0 0.0
    %517 = vmatprep.subr.mxu0 0.0
    %518 = vmatpush1.msra.mxu0 0.0
    %519 = vmatprep.subr.mxu0 0.0
    %520 = vmatpush1.msra.mxu0 0.0
    %521 = vmatprep.subr.mxu0 0.0
    %522 = vmatpush1.msra.mxu0 0.0
    %523 = vmatprep.subr.mxu0 0.0
    %524 = vmatpush1.msra.mxu0 0.0
    %525 = vmatprep.subr.mxu0 0.0
    %526 = vmatpush1.msra.mxu0 0.0
    %527 = vmatprep.subr.mxu0 0.0
    %528 = vmatpush1.msra.mxu0 0.0
    %529 = vmatprep.subr.mxu0 0.0
    %530 = vmatpush1.msra.mxu0 0.0
    %531 = vmatprep.subr.mxu0 0.0
    %532 = vmatpush1.msra.mxu0 0.0
    %533 = vmatprep.subr.mxu0 0.0
    %534 = vmatpush1.msra.mxu0 0.0
    %535 = vmatprep.subr.mxu0 0.0
    %536 = vmatpush1.msra.mxu0 0.0
    %537 = vmatprep.subr.mxu0 0.0
    %538 = vmatpush1.msra.mxu0 0.0
    %539 = vmatprep.subr.mxu0 0.0
    %540 = vmatpush1.msra.mxu0 0.0
    %541 = vmatprep.subr.mxu0 0.0
    %542 = vmatpush1.msra.mxu0 0.0
    %543 = vmatprep.subr.mxu0 0.0
    %544 = vmatpush1.msra.mxu0 0.0
    %545 = vmatprep.subr.mxu0 0.0
    %546 = vmatpush1.msra.mxu0 0.0
    %547 = vmatprep.subr.mxu0 0.0
    %548 = vmatpush1.msra.mxu0 0.0
    %549 = vmatprep.subr.mxu0 0.0
    %550 = vmatpush1.msra.mxu0 0.0
    %551 = vmatprep.subr.mxu0 0.0
    %552 = vmatpush1.msra.mxu0 0.0
    %553 = vmatprep.subr.mxu0 0.0
    %554 = vmatpush1.msra.mxu0 0.0
    %555 = vmatprep.subr.mxu0 0.0
    %556 = vmatpush1.msra.mxu0 0.0
    %557 = vmatprep.mubr.f32.mxu0 0.0
    %558 = vmatmul.mubr.f32.gmra.mrb[0].mxu0 %v351
    %v559 = vpop.f32.mrb[0].mxu0
    %v560 = vadd.f32 %v347, %v559
    %v561 = vpop.f32.mrb[0].mxu0
    %562 = vdwg.mxu0
    %v564 = vrot.slane %v420, 1
    %v567 = vadd.f32 %v151, %v420
    %v568 = vadd.f32 %v152, %v564
    %v569 = vxor.u32 %v567, 2147483648
    %v570 = vxor.u32 %v568, 2147483648
    %v571 = vmul.f32 %v569, 1.442695
    %v572 = vpow.pop %v571
    %v573 = vmul.f32 %v570, 1.442695
    %v574 = vpow.pop %v573
    %v575 = vadd.f32 %v572, 1.0
    %v576 = vadd.f32 %v574, 1.0
    %v577 = vrcp.pop %v575
    %v578 = vmul.f32 1.0, %v577
    %v579 = vrcp.pop %v576
    %v580 = vmul.f32 1.0, %v579
    %v582 = vrot.slane %v490, 1
    %v585 = vadd.f32 %v244, %v490
    %v586 = vadd.f32 %v245, %v582
    %v587 = vxor.u32 %v585, 2147483648
    %v588 = vxor.u32 %v586, 2147483648
    %v589 = vmul.f32 %v587, 1.442695
    %v590 = vpow.pop %v589
    %v591 = vmul.f32 %v588, 1.442695
    %v592 = vpow.pop %v591
    %v593 = vadd.f32 %v590, 1.0
    %v594 = vadd.f32 %v592, 1.0
    %v595 = vrcp.pop %v593
    %v596 = vmul.f32 1.0, %v595
    %v597 = vrcp.pop %v594
    %v598 = vmul.f32 1.0, %v597
    %v600 = vrot.slane %v560, 1
    %v603 = vmul.f32 %v578, %v560
    %v604 = vmul.f32 %v580, %v600
    %v605 = vadd.f32 %v322, %v603
    %v606 = vadd.f32 %v327, %v604
    %v607 = vtanh.pop %v605
    %v608 = vtanh.pop %v606
    %v609 = vsub.f32 1.0, %v596
    %v610 = vsub.f32 1.0, %v598
    %v611 = vmul.f32 %v609, %v607
    %v612 = vmul.f32 %v610, %v608
    %v613 = vmul.f32 %v596, 0.0
    %v614 = vmul.f32 %v598, 0.0
    %v615 = vadd.f32 %v611, %v613
    %v616 = vadd.f32 %v612, %v614
    %v619 = vrot.slane %v616, 7
    %vm620 = vcmask 1041409
    %v621 = vsel %vm620, %v619, %v615
    %v622 = vsel %vm349, %v621, 0
    %624 = vmatprep.subr.mxu0 0.0
    %625 = vmatpush1.msra.mxu0 %v330
    %626 = vmatprep.subr.mxu0 0.0
    %627 = vmatpush1.msra.mxu0 %v331
    %628 = vmatprep.subr.mxu0 0.0
    %629 = vmatpush1.msra.mxu0 %v332
    %630 = vmatprep.subr.mxu0 0.0
    %631 = vmatpush1.msra.mxu0 %v333
    %632 = vmatprep.subr.mxu0 0.0
    %633 = vmatpush1.msra.mxu0 0.0
    %634 = vmatprep.subr.mxu0 0.0
    %635 = vmatpush1.msra.mxu0 0.0
    %636 = vmatprep.subr.mxu0 0.0
    %637 = vmatpush1.msra.mxu0 0.0
    %638 = vmatprep.subr.mxu0 0.0
    %639 = vmatpush1.msra.mxu0 0.0
    %640 = vmatprep.subr.mxu0 0.0
    %641 = vmatpush1.msra.mxu0 0.0
    %642 = vmatprep.subr.mxu0 0.0
    %643 = vmatpush1.msra.mxu0 0.0
    %644 = vmatprep.subr.mxu0 0.0
    %645 = vmatpush1.msra.mxu0 0.0
    %646 = vmatprep.subr.mxu0 0.0
    %647 = vmatpush1.msra.mxu0 0.0
    %648 = vmatprep.subr.mxu0 0.0
    %649 = vmatpush1.msra.mxu0 0.0
    %650 = vmatprep.subr.mxu0 0.0
    %651 = vmatpush1.msra.mxu0 0.0
    %652 = vmatprep.subr.mxu0 0.0
    %653 = vmatpush1.msra.mxu0 0.0
    %654 = vmatprep.subr.mxu0 0.0
    %655 = vmatpush1.msra.mxu0 0.0
    %656 = vmatprep.subr.mxu0 0.0
    %657 = vmatpush1.msra.mxu0 0.0
    %658 = vmatprep.subr.mxu0 0.0
    %659 = vmatpush1.msra.mxu0 0.0
    %660 = vmatprep.subr.mxu0 0.0
    %661 = vmatpush1.msra.mxu0 0.0
    %662 = vmatprep.subr.mxu0 0.0
    %663 = vmatpush1.msra.mxu0 0.0
    %664 = vmatprep.subr.mxu0 0.0
    %665 = vmatpush1.msra.mxu0 0.0
    %666 = vmatprep.subr.mxu0 0.0
    %667 = vmatpush1.msra.mxu0 0.0
    %668 = vmatprep.subr.mxu0 0.0
    %669 = vmatpush1.msra.mxu0 0.0
    %670 = vmatprep.subr.mxu0 0.0
    %671 = vmatpush1.msra.mxu0 0.0
    %672 = vmatprep.subr.mxu0 0.0
    %673 = vmatpush1.msra.mxu0 0.0
    %674 = vmatprep.subr.mxu0 0.0
    %675 = vmatpush1.msra.mxu0 0.0
    %676 = vmatprep.subr.mxu0 0.0
    %677 = vmatpush1.msra.mxu0 0.0
    %678 = vmatprep.subr.mxu0 0.0
    %679 = vmatpush1.msra.mxu0 0.0
    %680 = vmatprep.subr.mxu0 0.0
    %681 = vmatpush1.msra.mxu0 0.0
    %682 = vmatprep.subr.mxu0 0.0
    %683 = vmatpush1.msra.mxu0 0.0
    %684 = vmatprep.subr.mxu0 0.0
    %685 = vmatpush1.msra.mxu0 0.0
    %686 = vmatprep.subr.mxu0 0.0
    %687 = vmatpush1.msra.mxu0 0.0
    %688 = vmatprep.mubr.f32.mxu0 0.0
    %689 = vmatmul.mubr.f32.gmra.mrb[0].mxu0 %v622
    %v690 = vpop.f32.mrb[0].mxu0
    %v691 = vadd.f32 0.0, %v690
    %v692 = vpop.f32.mrb[0].mxu0
    %693 = vdwg.mxu0
    %694 = vmatprep.subr.mxu0 0.0
    %695 = vmatpush1.msra.mxu0 %v334
    %696 = vmatprep.subr.mxu0 0.0
    %697 = vmatpush1.msra.mxu0 %v335
    %698 = vmatprep.subr.mxu0 0.0
    %699 = vmatpush1.msra.mxu0 %v336
    %700 = vmatprep.subr.mxu0 0.0
    %701 = vmatpush1.msra.mxu0 %v337
    %702 = vmatprep.subr.mxu0 0.0
    %703 = vmatpush1.msra.mxu0 0.0
    %704 = vmatprep.subr.mxu0 0.0
    %705 = vmatpush1.msra.mxu0 0.0
    %706 = vmatprep.subr.mxu0 0.0
    %707 = vmatpush1.msra.mxu0 0.0
    %708 = vmatprep.subr.mxu0 0.0
    %709 = vmatpush1.msra.mxu0 0.0
    %710 = vmatprep.subr.mxu0 0.0
    %711 = vmatpush1.msra.mxu0 0.0
    %712 = vmatprep.subr.mxu0 0.0
    %713 = vmatpush1.msra.mxu0 0.0
    %714 = vmatprep.subr.mxu0 0.0
    %715 = vmatpush1.msra.mxu0 0.0
    %716 = vmatprep.subr.mxu0 0.0
    %717 = vmatpush1.msra.mxu0 0.0
    %718 = vmatprep.subr.mxu0 0.0
    %719 = vmatpush1.msra.mxu0 0.0
    %720 = vmatprep.subr.mxu0 0.0
    %721 = vmatpush1.msra.mxu0 0.0
    %722 = vmatprep.subr.mxu0 0.0
    %723 = vmatpush1.msra.mxu0 0.0
    %724 = vmatprep.subr.mxu0 0.0
    %725 = vmatpush1.msra.mxu0 0.0
    %726 = vmatprep.subr.mxu0 0.0
    %727 = vmatpush1.msra.mxu0 0.0
    %728 = vmatprep.subr.mxu0 0.0
    %729 = vmatpush1.msra.mxu0 0.0
    %730 = vmatprep.subr.mxu0 0.0
    %731 = vmatpush1.msra.mxu0 0.0
    %732 = vmatprep.subr.mxu0 0.0
    %733 = vmatpush1.msra.mxu0 0.0
    %734 = vmatprep.subr.mxu0 0.0
    %735 = vmatpush1.msra.mxu0 0.0
    %736 = vmatprep.subr.mxu0 0.0
    %737 = vmatpush1.msra.mxu0 0.0
    %738 = vmatprep.subr.mxu0 0.0
    %739 = vmatpush1.msra.mxu0 0.0
    %740 = vmatprep.subr.mxu0 0.0
    %741 = vmatpush1.msra.mxu0 0.0
    %742 = vmatprep.subr.mxu0 0.0
    %743 = vmatpush1.msra.mxu0 0.0
    %744 = vmatprep.subr.mxu0 0.0
    %745 = vmatpush1.msra.mxu0 0.0
    %746 = vmatprep.subr.mxu0 0.0
    %747 = vmatpush1.msra.mxu0 0.0
    %748 = vmatprep.subr.mxu0 0.0
    %749 = vmatpush1.msra.mxu0 0.0
    %750 = vmatprep.subr.mxu0 0.0
    %751 = vmatpush1.msra.mxu0 0.0
    %752 = vmatprep.subr.mxu0 0.0
    %753 = vmatpush1.msra.mxu0 0.0
    %754 = vmatprep.subr.mxu0 0.0
    %755 = vmatpush1.msra.mxu0 0.0
    %756 = vmatprep.subr.mxu0 0.0
    %757 = vmatpush1.msra.mxu0 0.0
    %758 = vmatprep.mubr.f32.mxu0 0.0
    %759 = vmatmul.mubr.f32.gmra.mrb[0].mxu0 %v622
    %v760 = vpop.f32.mrb[0].mxu0
    %v761 = vadd.f32 0.0, %v760
    %v762 = vpop.f32.mrb[0].mxu0
    %763 = vdwg.mxu0
    %764 = vmatprep.subr.mxu0 0.0
    %765 = vmatpush1.msra.mxu0 %v338
    %766 = vmatprep.subr.mxu0 0.0
    %767 = vmatpush1.msra.mxu0 %v339
    %768 = vmatprep.subr.mxu0 0.0
    %769 = vmatpush1.msra.mxu0 %v340
    %770 = vmatprep.subr.mxu0 0.0
    %771 = vmatpush1.msra.mxu0 %v341
    %772 = vmatprep.subr.mxu0 0.0
    %773 = vmatpush1.msra.mxu0 0.0
    %774 = vmatprep.subr.mxu0 0.0
    %775 = vmatpush1.msra.mxu0 0.0
    %776 = vmatprep.subr.mxu0 0.0
    %777 = vmatpush1.msra.mxu0 0.0
    %778 = vmatprep.subr.mxu0 0.0
    %779 = vmatpush1.msra.mxu0 0.0
    %780 = vmatprep.subr.mxu0 0.0
    %781 = vmatpush1.msra.mxu0 0.0
    %782 = vmatprep.subr.mxu0 0.0
    %783 = vmatpush1.msra.mxu0 0.0
    %784 = vmatprep.subr.mxu0 0.0
    %785 = vmatpush1.msra.mxu0 0.0
    %786 = vmatprep.subr.mxu0 0.0
    %787 = vmatpush1.msra.mxu0 0.0
    %788 = vmatprep.subr.mxu0 0.0
    %789 = vmatpush1.msra.mxu0 0.0
    %790 = vmatprep.subr.mxu0 0.0
    %791 = vmatpush1.msra.mxu0 0.0
    %792 = vmatprep.subr.mxu0 0.0
    %793 = vmatpush1.msra.mxu0 0.0
    %794 = vmatprep.subr.mxu0 0.0
    %795 = vmatpush1.msra.mxu0 0.0
    %796 = vmatprep.subr.mxu0 0.0
    %797 = vmatpush1.msra.mxu0 0.0
    %798 = vmatprep.subr.mxu0 0.0
    %799 = vmatpush1.msra.mxu0 0.0
    %800 = vmatprep.subr.mxu0 0.0
    %801 = vmatpush1.msra.mxu0 0.0
    %802 = vmatprep.subr.mxu0 0.0
    %803 = vmatpush1.msra.mxu0 0.0
    %804 = vmatprep.subr.mxu0 0.0
    %805 = vmatpush1.msra.mxu0 0.0
    %806 = vmatprep.subr.mxu0 0.0
    %807 = vmatpush1.msra.mxu0 0.0
    %808 = vmatprep.subr.mxu0 0.0
    %809 = vmatpush1.msra.mxu0 0.0
    %810 = vmatprep.subr.mxu0 0.0
    %811 = vmatpush1.msra.mxu0 0.0
    %812 = vmatprep.subr.mxu0 0.0
    %813 = vmatpush1.msra.mxu0 0.0
    %814 = vmatprep.subr.mxu0 0.0
    %815 = vmatpush1.msra.mxu0 0.0
    %816 = vmatprep.subr.mxu0 0.0
    %817 = vmatpush1.msra.mxu0 0.0
    %818 = vmatprep.subr.mxu0 0.0
    %819 = vmatpush1.msra.mxu0 0.0
    %820 = vmatprep.subr.mxu0 0.0
    %821 = vmatpush1.msra.mxu0 0.0
    %822 = vmatprep.subr.mxu0 0.0
    %823 = vmatpush1.msra.mxu0 0.0
    %824 = vmatprep.subr.mxu0 0.0
    %825 = vmatpush1.msra.mxu0 0.0
    %826 = vmatprep.subr.mxu0 0.0
    %827 = vmatpush1.msra.mxu0 0.0
    %828 = vmatprep.mubr.f32.mxu0 0.0
    %829 = vmatmul.mubr.f32.gmra.mrb[0].mxu0 %v622
    %v830 = vpop.f32.mrb[0].mxu0
    %v831 = vadd.f32 %v347, %v830
    %v832 = vpop.f32.mrb[0].mxu0
    %833 = vdwg.mxu0
    %v835 = vrot.slane %v691, 7
    %v838 = vadd.f32 %v151, %v835
    %v839 = vadd.f32 %v152, %v691
    %v840 = vxor.u32 %v838, 2147483648
    %v841 = vxor.u32 %v839, 2147483648
    %v842 = vmul.f32 %v840, 1.442695
    %v843 = vpow.pop %v842
    %v844 = vmul.f32 %v841, 1.442695
    %v845 = vpow.pop %v844
    %v846 = vadd.f32 %v843, 1.0
    %v847 = vadd.f32 %v845, 1.0
    %v848 = vrcp.pop %v846
    %v849 = vmul.f32 1.0, %v848
    %v850 = vrcp.pop %v847
    %v851 = vmul.f32 1.0, %v850
    %v853 = vrot.slane %v761, 7
    %v856 = vadd.f32 %v244, %v853
    %v857 = vadd.f32 %v245, %v761
    %v858 = vxor.u32 %v856, 2147483648
    %v859 = vxor.u32 %v857, 2147483648
    %v860 = vmul.f32 %v858, 1.442695
    %v861 = vpow.pop %v860
    %v862 = vmul.f32 %v859, 1.442695
    %v863 = vpow.pop %v862
    %v864 = vadd.f32 %v861, 1.0
    %v865 = vadd.f32 %v863, 1.0
    %v866 = vrcp.pop %v864
    %v867 = vmul.f32 1.0, %v866
    %v868 = vrcp.pop %v865
    %v869 = vmul.f32 1.0, %v868
    %v871 = vrot.slane %v831, 7
    %v874 = vmul.f32 %v849, %v871
    %v875 = vmul.f32 %v851, %v831
    %v876 = vadd.f32 %v322, %v874
    %v877 = vadd.f32 %v327, %v875
    %v878 = vtanh.pop %v876
    %v879 = vtanh.pop %v877
    %v880 = vsub.f32 1.0, %v867
    %v881 = vsub.f32 1.0, %v869
    %v882 = vmul.f32 %v880, %v878
    %v883 = vmul.f32 %v881, %v879
    %v884 = vrot.slane %v615, 7
    %v887 = vmul.f32 %v867, %v884
    %v888 = vmul.f32 %v869, %v619
    %v889 = vadd.f32 %v882, %v887
    %v890 = vadd.f32 %v883, %v888
    %v893 = vrot.slane %v889, 1
    %v894 = vsel %vm620, %v890, %v893
    %v895 = vsel %vm349, %v894, 0
    %897 = vmatprep.subr.mxu0 0.0
    %898 = vmatpush1.msra.mxu0 %v330
    %899 = vmatprep.subr.mxu0 0.0
    %900 = vmatpush1.msra.mxu0 %v331
    %901 = vmatprep.subr.mxu0 0.0
    %902 = vmatpush1.msra.mxu0 %v332
    %903 = vmatprep.subr.mxu0 0.0
    %904 = vmatpush1.msra.mxu0 %v333
    %905 = vmatprep.subr.mxu0 0.0
    %906 = vmatpush1.msra.mxu0 0.0
    %907 = vmatprep.subr.mxu0 0.0
    %908 = vmatpush1.msra.mxu0 0.0
    %909 = vmatprep.subr.mxu0 0.0
    %910 = vmatpush1.msra.mxu0 0.0
    %911 = vmatprep.subr.mxu0 0.0
    %912 = vmatpush1.msra.mxu0 0.0
    %913 = vmatprep.subr.mxu0 0.0
    %914 = vmatpush1.msra.mxu0 0.0
    %915 = vmatprep.subr.mxu0 0.0
    %916 = vmatpush1.msra.mxu0 0.0
    %917 = vmatprep.subr.mxu0 0.0
    %918 = vmatpush1.msra.mxu0 0.0
    %919 = vmatprep.subr.mxu0 0.0
    %920 = vmatpush1.msra.mxu0 0.0
    %921 = vmatprep.subr.mxu0 0.0
    %922 = vmatpush1.msra.mxu0 0.0
    %923 = vmatprep.subr.mxu0 0.0
    %924 = vmatpush1.msra.mxu0 0.0
    %925 = vmatprep.subr.mxu0 0.0
    %926 = vmatpush1.msra.mxu0 0.0
    %927 = vmatprep.subr.mxu0 0.0
    %928 = vmatpush1.msra.mxu0 0.0
    %929 = vmatprep.subr.mxu0 0.0
    %930 = vmatpush1.msra.mxu0 0.0
    %931 = vmatprep.subr.mxu0 0.0
    %932 = vmatpush1.msra.mxu0 0.0
    %933 = vmatprep.subr.mxu0 0.0
    %934 = vmatpush1.msra.mxu0 0.0
    %935 = vmatprep.subr.mxu0 0.0
    %936 = vmatpush1.msra.mxu0 0.0
    %937 = vmatprep.subr.mxu0 0.0
    %938 = vmatpush1.msra.mxu0 0.0
    %939 = vmatprep.subr.mxu0 0.0
    %940 = vmatpush1.msra.mxu0 0.0
    %941 = vmatprep.subr.mxu0 0.0
    %942 = vmatpush1.msra.mxu0 0.0
    %943 = vmatprep.subr.mxu0 0.0
    %944 = vmatpush1.msra.mxu0 0.0
    %945 = vmatprep.subr.mxu0 0.0
    %946 = vmatpush1.msra.mxu0 0.0
    %947 = vmatprep.subr.mxu0 0.0
    %948 = vmatpush1.msra.mxu0 0.0
    %949 = vmatprep.subr.mxu0 0.0
    %950 = vmatpush1.msra.mxu0 0.0
    %951 = vmatprep.subr.mxu0 0.0
    %952 = vmatpush1.msra.mxu0 0.0
    %953 = vmatprep.subr.mxu0 0.0
    %954 = vmatpush1.msra.mxu0 0.0
    %955 = vmatprep.subr.mxu0 0.0
    %956 = vmatpush1.msra.mxu0 0.0
    %957 = vmatprep.subr.mxu0 0.0
    %958 = vmatpush1.msra.mxu0 0.0
    %959 = vmatprep.subr.mxu0 0.0
    %960 = vmatpush1.msra.mxu0 0.0
    %961 = vmatprep.mubr.f32.mxu0 0.0
    %962 = vmatmul.mubr.f32.gmra.mrb[0].mxu0 %v895
    %v963 = vpop.f32.mrb[0].mxu0
    %v964 = vadd.f32 0.0, %v963
    %v965 = vpop.f32.mrb[0].mxu0
    %966 = vdwg.mxu0
    %967 = vmatprep.subr.mxu0 0.0
    %968 = vmatpush1.msra.mxu0 %v334
    %969 = vmatprep.subr.mxu0 0.0
    %970 = vmatpush1.msra.mxu0 %v335
    %971 = vmatprep.subr.mxu0 0.0
    %972 = vmatpush1.msra.mxu0 %v336
    %973 = vmatprep.subr.mxu0 0.0
    %974 = vmatpush1.msra.mxu0 %v337
    %975 = vmatprep.subr.mxu0 0.0
    %976 = vmatpush1.msra.mxu0 0.0
    %977 = vmatprep.subr.mxu0 0.0
    %978 = vmatpush1.msra.mxu0 0.0
    %979 = vmatprep.subr.mxu0 0.0
    %980 = vmatpush1.msra.mxu0 0.0
    %981 = vmatprep.subr.mxu0 0.0
    %982 = vmatpush1.msra.mxu0 0.0
    %983 = vmatprep.subr.mxu0 0.0
    %984 = vmatpush1.msra.mxu0 0.0
    %985 = vmatprep.subr.mxu0 0.0
    %986 = vmatpush1.msra.mxu0 0.0
    %987 = vmatprep.subr.mxu0 0.0
    %988 = vmatpush1.msra.mxu0 0.0
    %989 = vmatprep.subr.mxu0 0.0
    %990 = vmatpush1.msra.mxu0 0.0
    %991 = vmatprep.subr.mxu0 0.0
    %992 = vmatpush1.msra.mxu0 0.0
    %993 = vmatprep.subr.mxu0 0.0
    %994 = vmatpush1.msra.mxu0 0.0
    %995 = vmatprep.subr.mxu0 0.0
    %996 = vmatpush1.msra.mxu0 0.0
    %997 = vmatprep.subr.mxu0 0.0
    %998 = vmatpush1.msra.mxu0 0.0
    %999 = vmatprep.subr.mxu0 0.0
    %1000 = vmatpush1.msra.mxu0 0.0
    %1001 = vmatprep.subr.mxu0 0.0
    %1002 = vmatpush1.msra.mxu0 0.0
    %1003 = vmatprep.subr.mxu0 0.0
    %1004 = vmatpush1.msra.mxu0 0.0
    %1005 = vmatprep.subr.mxu0 0.0
    %1006 = vmatpush1.msra.mxu0 0.0
    %1007 = vmatprep.subr.mxu0 0.0
    %1008 = vmatpush1.msra.mxu0 0.0
    %1009 = vmatprep.subr.mxu0 0.0
    %1010 = vmatpush1.msra.mxu0 0.0
    %1011 = vmatprep.subr.mxu0 0.0
    %1012 = vmatpush1.msra.mxu0 0.0
    %1013 = vmatprep.subr.mxu0 0.0
    %1014 = vmatpush1.msra.mxu0 0.0
    %1015 = vmatprep.subr.mxu0 0.0
    %1016 = vmatpush1.msra.mxu0 0.0
    %1017 = vmatprep.subr.mxu0 0.0
    %1018 = vmatpush1.msra.mxu0 0.0
    %1019 = vmatprep.subr.mxu0 0.0
    %1020 = vmatpush1.msra.mxu0 0.0
    %1021 = vmatprep.subr.mxu0 0.0
    %1022 = vmatpush1.msra.mxu0 0.0
    %1023 = vmatprep.subr.mxu0 0.0
    %1024 = vmatpush1.msra.mxu0 0.0
    %1025 = vmatprep.subr.mxu0 0.0
    %1026 = vmatpush1.msra.mxu0 0.0
    %1027 = vmatprep.subr.mxu0 0.0
    %1028 = vmatpush1.msra.mxu0 0.0
    %1029 = vmatprep.subr.mxu0 0.0
    %1030 = vmatpush1.msra.mxu0 0.0
    %1031 = vmatprep.mubr.f32.mxu0 0.0
    %1032 = vmatmul.mubr.f32.gmra.mrb[0].mxu0 %v895
    %v1033 = vpop.f32.mrb[0].mxu0
    %v1034 = vadd.f32 0.0, %v1033
    %v1035 = vpop.f32.mrb[0].mxu0
    %1036 = vdwg.mxu0
    %1037 = vmatprep.subr.mxu0 0.0
    %1038 = vmatpush1.msra.mxu0 %v338
    %1039 = vmatprep.subr.mxu0 0.0
    %1040 = vmatpush1.msra.mxu0 %v339
    %1041 = vmatprep.subr.mxu0 0.0
    %1042 = vmatpush1.msra.mxu0 %v340
    %1043 = vmatprep.subr.mxu0 0.0
    %1044 = vmatpush1.msra.mxu0 %v341
    %1045 = vmatprep.subr.mxu0 0.0
    %1046 = vmatpush1.msra.mxu0 0.0
    %1047 = vmatprep.subr.mxu0 0.0
    %1048 = vmatpush1.msra.mxu0 0.0
    %1049 = vmatprep.subr.mxu0 0.0
    %1050 = vmatpush1.msra.mxu0 0.0
    %1051 = vmatprep.subr.mxu0 0.0
    %1052 = vmatpush1.msra.mxu0 0.0
    %1053 = vmatprep.subr.mxu0 0.0
    %1054 = vmatpush1.msra.mxu0 0.0
    %1055 = vmatprep.subr.mxu0 0.0
    %1056 = vmatpush1.msra.mxu0 0.0
    %1057 = vmatprep.subr.mxu0 0.0
    %1058 = vmatpush1.msra.mxu0 0.0
    %1059 = vmatprep.subr.mxu0 0.0
    %1060 = vmatpush1.msra.mxu0 0.0
    %1061 = vmatprep.subr.mxu0 0.0
    %1062 = vmatpush1.msra.mxu0 0.0
    %1063 = vmatprep.subr.mxu0 0.0
    %1064 = vmatpush1.msra.mxu0 0.0
    %1065 = vmatprep.subr.mxu0 0.0
    %1066 = vmatpush1.msra.mxu0 0.0
    %1067 = vmatprep.subr.mxu0 0.0
    %1068 = vmatpush1.msra.mxu0 0.0
    %1069 = vmatprep.subr.mxu0 0.0
    %1070 = vmatpush1.msra.mxu0 0.0
    %1071 = vmatprep.subr.mxu0 0.0
    %1072 = vmatpush1.msra.mxu0 0.0
    %1073 = vmatprep.subr.mxu0 0.0
    %1074 = vmatpush1.msra.mxu0 0.0
    %1075 = vmatprep.subr.mxu0 0.0
    %1076 = vmatpush1.msra.mxu0 0.0
    %1077 = vmatprep.subr.mxu0 0.0
    %1078 = vmatpush1.msra.mxu0 0.0
    %1079 = vmatprep.subr.mxu0 0.0
    %1080 = vmatpush1.msra.mxu0 0.0
    %1081 = vmatprep.subr.mxu0 0.0
    %1082 = vmatpush1.msra.mxu0 0.0
    %1083 = vmatprep.subr.mxu0 0.0
    %1084 = vmatpush1.msra.mxu0 0.0
    %1085 = vmatprep.subr.mxu0 0.0
    %1086 = vmatpush1.msra.mxu0 0.0
    %1087 = vmatprep.subr.mxu0 0.0
    %1088 = vmatpush1.msra.mxu0 0.0
    %1089 = vmatprep.subr.mxu0 0.0
    %1090 = vmatpush1.msra.mxu0 0.0
    %1091 = vmatprep.subr.mxu0 0.0
    %1092 = vmatpush1.msra.mxu0 0.0
    %1093 = vmatprep.subr.mxu0 0.0
    %1094 = vmatpush1.msra.mxu0 0.0
    %1095 = vmatprep.subr.mxu0 0.0
    %1096 = vmatpush1.msra.mxu0 0.0
    %1097 = vmatprep.subr.mxu0 0.0
    %1098 = vmatpush1.msra.mxu0 0.0
    %1099 = vmatprep.subr.mxu0 0.0
    %1100 = vmatpush1.msra.mxu0 0.0
    %1101 = vmatprep.mubr.f32.mxu0 0.0
    %1102 = vmatmul.mubr.f32.gmra.mrb[0].mxu0 %v895
    %v1103 = vpop.f32.mrb[0].mxu0
    %v1104 = vadd.f32 %v347, %v1103
    %v1105 = vpop.f32.mrb[0].mxu0
    %1106 = vdwg.mxu0
    %v1108 = vrot.slane %v964, 6
    %v1109 = vrot.slane %v964, 7
    %v1112 = vadd.f32 %v151, %v1108
    %v1113 = vadd.f32 %v152, %v1109
    %v1114 = vxor.u32 %v1112, 2147483648
    %v1115 = vxor.u32 %v1113, 2147483648
    %v1116 = vmul.f32 %v1114, 1.442695
    %v1117 = vpow.pop %v1116
    %v1118 = vmul.f32 %v1115, 1.442695
    %v1119 = vpow.pop %v1118
    %v1120 = vadd.f32 %v1117, 1.0
    %v1121 = vadd.f32 %v1119, 1.0
    %v1122 = vrcp.pop %v1120
    %v1123 = vmul.f32 1.0, %v1122
    %v1124 = vrcp.pop %v1121
    %v1125 = vmul.f32 1.0, %v1124
    %v1127 = vrot.slane %v1034, 6
    %v1128 = vrot.slane %v1034, 7
    %v1131 = vadd.f32 %v244, %v1127
    %v1132 = vadd.f32 %v245, %v1128
    %v1133 = vxor.u32 %v1131, 2147483648
    %v1134 = vxor.u32 %v1132, 2147483648
    %v1135 = vmul.f32 %v1133, 1.442695
    %v1136 = vpow.pop %v1135
    %v1137 = vmul.f32 %v1134, 1.442695
    %v1138 = vpow.pop %v1137
    %v1139 = vadd.f32 %v1136, 1.0
    %v1140 = vadd.f32 %v1138, 1.0
    %v1141 = vrcp.pop %v1139
    %v1142 = vmul.f32 1.0, %v1141
    %v1143 = vrcp.pop %v1140
    %v1144 = vmul.f32 1.0, %v1143
    %v1146 = vrot.slane %v1104, 6
    %v1147 = vrot.slane %v1104, 7
    %v1150 = vmul.f32 %v1123, %v1146
    %v1151 = vmul.f32 %v1125, %v1147
    %v1152 = vadd.f32 %v322, %v1150
    %v1153 = vadd.f32 %v327, %v1151
    %v1154 = vtanh.pop %v1152
    %v1155 = vtanh.pop %v1153
    %v1156 = vsub.f32 1.0, %v1142
    %v1157 = vsub.f32 1.0, %v1144
    %v1158 = vmul.f32 %v1156, %v1154
    %v1159 = vmul.f32 %v1157, %v1155
    %v1160 = vrot.slane %v889, 7
    %v1161 = vrot.slane %v890, 7
    %v1164 = vmul.f32 %v1142, %v1160
    %v1165 = vmul.f32 %v1144, %v1161
    %v1166 = vadd.f32 %v1158, %v1164
    %v1167 = vadd.f32 %v1159, %v1165
    %v1170 = vrot.slane %v1166, 2
    %v1171 = vrot.slane %v1167, 1
    %v1172 = vsel %vm620, %v1171, %v1170
    %v1173 = vsel %vm349, %v1172, 0
    %1175 = vmatprep.subr.mxu0 0.0
    %1176 = vmatpush1.msra.mxu0 %v330
    %1177 = vmatprep.subr.mxu0 0.0
    %1178 = vmatpush1.msra.mxu0 %v331
    %1179 = vmatprep.subr.mxu0 0.0
    %1180 = vmatpush1.msra.mxu0 %v332
    %1181 = vmatprep.subr.mxu0 0.0
    %1182 = vmatpush1.msra.mxu0 %v333
    %1183 = vmatprep.subr.mxu0 0.0
    %1184 = vmatpush1.msra.mxu0 0.0
    %1185 = vmatprep.subr.mxu0 0.0
    %1186 = vmatpush1.msra.mxu0 0.0
    %1187 = vmatprep.subr.mxu0 0.0
    %1188 = vmatpush1.msra.mxu0 0.0
    %1189 = vmatprep.subr.mxu0 0.0
    %1190 = vmatpush1.msra.mxu0 0.0
    %1191 = vmatprep.subr.mxu0 0.0
    %1192 = vmatpush1.msra.mxu0 0.0
    %1193 = vmatprep.subr.mxu0 0.0
    %1194 = vmatpush1.msra.mxu0 0.0
    %1195 = vmatprep.subr.mxu0 0.0
    %1196 = vmatpush1.msra.mxu0 0.0
    %1197 = vmatprep.subr.mxu0 0.0
    %1198 = vmatpush1.msra.mxu0 0.0
    %1199 = vmatprep.subr.mxu0 0.0
    %1200 = vmatpush1.msra.mxu0 0.0
    %1201 = vmatprep.subr.mxu0 0.0
    %1202 = vmatpush1.msra.mxu0 0.0
    %1203 = vmatprep.subr.mxu0 0.0
    %1204 = vmatpush1.msra.mxu0 0.0
    %1205 = vmatprep.subr.mxu0 0.0
    %1206 = vmatpush1.msra.mxu0 0.0
    %1207 = vmatprep.subr.mxu0 0.0
    %1208 = vmatpush1.msra.mxu0 0.0
    %1209 = vmatprep.subr.mxu0 0.0
    %1210 = vmatpush1.msra.mxu0 0.0
    %1211 = vmatprep.subr.mxu0 0.0
    %1212 = vmatpush1.msra.mxu0 0.0
    %1213 = vmatprep.subr.mxu0 0.0
    %1214 = vmatpush1.msra.mxu0 0.0
    %1215 = vmatprep.subr.mxu0 0.0
    %1216 = vmatpush1.msra.mxu0 0.0
    %1217 = vmatprep.subr.mxu0 0.0
    %1218 = vmatpush1.msra.mxu0 0.0
    %1219 = vmatprep.subr.mxu0 0.0
    %1220 = vmatpush1.msra.mxu0 0.0
    %1221 = vmatprep.subr.mxu0 0.0
    %1222 = vmatpush1.msra.mxu0 0.0
    %1223 = vmatprep.subr.mxu0 0.0
    %1224 = vmatpush1.msra.mxu0 0.0
    %1225 = vmatprep.subr.mxu0 0.0
    %1226 = vmatpush1.msra.mxu0 0.0
    %1227 = vmatprep.subr.mxu0 0.0
    %1228 = vmatpush1.msra.mxu0 0.0
    %1229 = vmatprep.subr.mxu0 0.0
    %1230 = vmatpush1.msra.mxu0 0.0
    %1231 = vmatprep.subr.mxu0 0.0
    %1232 = vmatpush1.msra.mxu0 0.0
    %1233 = vmatprep.subr.mxu0 0.0
    %1234 = vmatpush1.msra.mxu0 0.0
    %1235 = vmatprep.subr.mxu0 0.0
    %1236 = vmatpush1.msra.mxu0 0.0
    %1237 = vmatprep.subr.mxu0 0.0
    %1238 = vmatpush1.msra.mxu0 0.0
    %1239 = vmatprep.mubr.f32.mxu0 0.0
    %1240 = vmatmul.mubr.f32.gmra.mrb[0].mxu0 %v1173
    %v1241 = vpop.f32.mrb[0].mxu0
    %v1242 = vadd.f32 0.0, %v1241
    %v1243 = vpop.f32.mrb[0].mxu0
    %1244 = vdwg.mxu0
    %1245 = vmatprep.subr.mxu0 0.0
    %1246 = vmatpush1.msra.mxu0 %v334
    %1247 = vmatprep.subr.mxu0 0.0
    %1248 = vmatpush1.msra.mxu0 %v335
    %1249 = vmatprep.subr.mxu0 0.0
    %1250 = vmatpush1.msra.mxu0 %v336
    %1251 = vmatprep.subr.mxu0 0.0
    %1252 = vmatpush1.msra.mxu0 %v337
    %1253 = vmatprep.subr.mxu0 0.0
    %1254 = vmatpush1.msra.mxu0 0.0
    %1255 = vmatprep.subr.mxu0 0.0
    %1256 = vmatpush1.msra.mxu0 0.0
    %1257 = vmatprep.subr.mxu0 0.0
    %1258 = vmatpush1.msra.mxu0 0.0
    %1259 = vmatprep.subr.mxu0 0.0
    %1260 = vmatpush1.msra.mxu0 0.0
    %1261 = vmatprep.subr.mxu0 0.0
    %1262 = vmatpush1.msra.mxu0 0.0
    %1263 = vmatprep.subr.mxu0 0.0
    %1264 = vmatpush1.msra.mxu0 0.0
    %1265 = vmatprep.subr.mxu0 0.0
    %1266 = vmatpush1.msra.mxu0 0.0
    %1267 = vmatprep.subr.mxu0 0.0
    %1268 = vmatpush1.msra.mxu0 0.0
    %1269 = vmatprep.subr.mxu0 0.0
    %1270 = vmatpush1.msra.mxu0 0.0
    %1271 = vmatprep.subr.mxu0 0.0
    %1272 = vmatpush1.msra.mxu0 0.0
    %1273 = vmatprep.subr.mxu0 0.0
    %1274 = vmatpush1.msra.mxu0 0.0
    %1275 = vmatprep.subr.mxu0 0.0
    %1276 = vmatpush1.msra.mxu0 0.0
    %1277 = vmatprep.subr.mxu0 0.0
    %1278 = vmatpush1.msra.mxu0 0.0
    %1279 = vmatprep.subr.mxu0 0.0
    %1280 = vmatpush1.msra.mxu0 0.0
    %1281 = vmatprep.subr.mxu0 0.0
    %1282 = vmatpush1.msra.mxu0 0.0
    %1283 = vmatprep.subr.mxu0 0.0
    %1284 = vmatpush1.msra.mxu0 0.0
    %1285 = vmatprep.subr.mxu0 0.0
    %1286 = vmatpush1.msra.mxu0 0.0
    %1287 = vmatprep.subr.mxu0 0.0
    %1288 = vmatpush1.msra.mxu0 0.0
    %1289 = vmatprep.subr.mxu0 0.0
    %1290 = vmatpush1.msra.mxu0 0.0
    %1291 = vmatprep.subr.mxu0 0.0
    %1292 = vmatpush1.msra.mxu0 0.0
    %1293 = vmatprep.subr.mxu0 0.0
    %1294 = vmatpush1.msra.mxu0 0.0
    %1295 = vmatprep.subr.mxu0 0.0
    %1296 = vmatpush1.msra.mxu0 0.0
    %1297 = vmatprep.subr.mxu0 0.0
    %1298 = vmatpush1.msra.mxu0 0.0
    %1299 = vmatprep.subr.mxu0 0.0
    %1300 = vmatpush1.msra.mxu0 0.0
    %1301 = vmatprep.subr.mxu0 0.0
    %1302 = vmatpush1.msra.mxu0 0.0
    %1303 = vmatprep.subr.mxu0 0.0
    %1304 = vmatpush1.msra.mxu0 0.0
    %1305 = vmatprep.subr.mxu0 0.0
    %1306 = vmatpush1.msra.mxu0 0.0
    %1307 = vmatprep.subr.mxu0 0.0
    %1308 = vmatpush1.msra.mxu0 0.0
    %1309 = vmatprep.mubr.f32.mxu0 0.0
    %1310 = vmatmul.mubr.f32.gmra.mrb[0].mxu0 %v1173
    %v1311 = vpop.f32.mrb[0].mxu0
    %v1312 = vadd.f32 0.0, %v1311
    %v1313 = vpop.f32.mrb[0].mxu0
    %1314 = vdwg.mxu0
    %1315 = vmatprep.subr.mxu0 0.0
    %1316 = vmatpush1.msra.mxu0 %v338
    %1317 = vmatprep.subr.mxu0 0.0
    %1318 = vmatpush1.msra.mxu0 %v339
    %1319 = vmatprep.subr.mxu0 0.0
    %1320 = vmatpush1.msra.mxu0 %v340
    %1321 = vmatprep.subr.mxu0 0.0
    %1322 = vmatpush1.msra.mxu0 %v341
    %1323 = vmatprep.subr.mxu0 0.0
    %1324 = vmatpush1.msra.mxu0 0.0
    %1325 = vmatprep.subr.mxu0 0.0
    %1326 = vmatpush1.msra.mxu0 0.0
    %1327 = vmatprep.subr.mxu0 0.0
    %1328 = vmatpush1.msra.mxu0 0.0
    %1329 = vmatprep.subr.mxu0 0.0
    %1330 = vmatpush1.msra.mxu0 0.0
    %1331 = vmatprep.subr.mxu0 0.0
    %1332 = vmatpush1.msra.mxu0 0.0
    %1333 = vmatprep.subr.mxu0 0.0
    %1334 = vmatpush1.msra.mxu0 0.0
    %1335 = vmatprep.subr.mxu0 0.0
    %1336 = vmatpush1.msra.mxu0 0.0
    %1337 = vmatprep.subr.mxu0 0.0
    %1338 = vmatpush1.msra.mxu0 0.0
    %1339 = vmatprep.subr.mxu0 0.0
    %1340 = vmatpush1.msra.mxu0 0.0
    %1341 = vmatprep.subr.mxu0 0.0
    %1342 = vmatpush1.msra.mxu0 0.0
    %1343 = vmatprep.subr.mxu0 0.0
    %1344 = vmatpush1.msra.mxu0 0.0
    %1345 = vmatprep.subr.mxu0 0.0
    %1346 = vmatpush1.msra.mxu0 0.0
    %1347 = vmatprep.subr.mxu0 0.0
    %1348 = vmatpush1.msra.mxu0 0.0
    %1349 = vmatprep.subr.mxu0 0.0
    %1350 = vmatpush1.msra.mxu0 0.0
    %1351 = vmatprep.subr.mxu0 0.0
    %1352 = vmatpush1.msra.mxu0 0.0
    %1353 = vmatprep.subr.mxu0 0.0
    %1354 = vmatpush1.msra.mxu0 0.0
    %1355 = vmatprep.subr.mxu0 0.0
    %1356 = vmatpush1.msra.mxu0 0.0
    %1357 = vmatprep.subr.mxu0 0.0
    %1358 = vmatpush1.msra.mxu0 0.0
    %1359 = vmatprep.subr.mxu0 0.0
    %1360 = vmatpush1.msra.mxu0 0.0
    %1361 = vmatprep.subr.mxu0 0.0
    %1362 = vmatpush1.msra.mxu0 0.0
    %1363 = vmatprep.subr.mxu0 0.0
    %1364 = vmatpush1.msra.mxu0 0.0
    %1365 = vmatprep.subr.mxu0 0.0
    %1366 = vmatpush1.msra.mxu0 0.0
    %1367 = vmatprep.subr.mxu0 0.0
    %1368 = vmatpush1.msra.mxu0 0.0
    %1369 = vmatprep.subr.mxu0 0.0
    %1370 = vmatpush1.msra.mxu0 0.0
    %1371 = vmatprep.subr.mxu0 0.0
    %1372 = vmatpush1.msra.mxu0 0.0
    %1373 = vmatprep.subr.mxu0 0.0
    %1374 = vmatpush1.msra.mxu0 0.0
    %1375 = vmatprep.subr.mxu0 0.0
    %1376 = vmatpush1.msra.mxu0 0.0
    %1377 = vmatprep.subr.mxu0 0.0
    %1378 = vmatpush1.msra.mxu0 0.0
    %1379 = vmatprep.mubr.f32.mxu0 0.0
    %1380 = vmatmul.mubr.f32.gmra.mrb[0].mxu0 %v1173
    %v1381 = vpop.f32.mrb[0].mxu0
    %v1382 = vadd.f32 %v347, %v1381
    %v1383 = vpop.f32.mrb[0].mxu0
    %1384 = vdwg.mxu0
    %v1386 = vrot.slane %v1242, 5
    %v1387 = vrot.slane %v1242, 6
    %v1390 = vadd.f32 %v151, %v1386
    %v1391 = vadd.f32 %v152, %v1387
    %v1392 = vxor.u32 %v1390, 2147483648
    %v1393 = vxor.u32 %v1391, 2147483648
    %v1394 = vmul.f32 %v1392, 1.442695
    %v1395 = vpow.pop %v1394
    %v1396 = vmul.f32 %v1393, 1.442695
    %v1397 = vpow.pop %v1396
    %v1398 = vadd.f32 %v1395, 1.0
    %v1399 = vadd.f32 %v1397, 1.0
    %v1400 = vrcp.pop %v1398
    %v1401 = vmul.f32 1.0, %v1400
    %v1402 = vrcp.pop %v1399
    %v1403 = vmul.f32 1.0, %v1402
    %v1405 = vrot.slane %v1312, 5
    %v1406 = vrot.slane %v1312, 6
    %v1409 = vadd.f32 %v244, %v1405
    %v1410 = vadd.f32 %v245, %v1406
    %v1411 = vxor.u32 %v1409, 2147483648
    %v1412 = vxor.u32 %v1410, 2147483648
    %v1413 = vmul.f32 %v1411, 1.442695
    %v1414 = vpow.pop %v1413
    %v1415 = vmul.f32 %v1412, 1.442695
    %v1416 = vpow.pop %v1415
    %v1417 = vadd.f32 %v1414, 1.0
    %v1418 = vadd.f32 %v1416, 1.0
    %v1419 = vrcp.pop %v1417
    %v1420 = vmul.f32 1.0, %v1419
    %v1421 = vrcp.pop %v1418
    %v1422 = vmul.f32 1.0, %v1421
    %v1424 = vrot.slane %v1382, 5
    %v1425 = vrot.slane %v1382, 6
    %v1428 = vmul.f32 %v1401, %v1424
    %v1429 = vmul.f32 %v1403, %v1425
    %v1430 = vadd.f32 %v322, %v1428
    %v1431 = vadd.f32 %v327, %v1429
    %v1432 = vtanh.pop %v1430
    %v1433 = vtanh.pop %v1431
    %v1434 = vsub.f32 1.0, %v1420
    %v1435 = vsub.f32 1.0, %v1422
    %v1436 = vmul.f32 %v1434, %v1432
    %v1437 = vmul.f32 %v1435, %v1433
    %v1438 = vrot.slane %v1166, 7
    %v1439 = vrot.slane %v1167, 7
    %v1442 = vmul.f32 %v1420, %v1438
    %v1443 = vmul.f32 %v1422, %v1439
    %v1444 = vadd.f32 %v1436, %v1442
    %v1445 = vadd.f32 %v1437, %v1443
    %v1448 = vrot.slane %v1444, 3
    %v1449 = vrot.slane %v1445, 2
    %v1450 = vsel %vm620, %v1449, %v1448
    %v1451 = vsel %vm349, %v1450, 0
    %1453 = vmatprep.subr.mxu0 0.0
    %1454 = vmatpush1.msra.mxu0 %v330
    %1455 = vmatprep.subr.mxu0 0.0
    %1456 = vmatpush1.msra.mxu0 %v331
    %1457 = vmatprep.subr.mxu0 0.0
    %1458 = vmatpush1.msra.mxu0 %v332
    %1459 = vmatprep.subr.mxu0 0.0
    %1460 = vmatpush1.msra.mxu0 %v333
    %1461 = vmatprep.subr.mxu0 0.0
    %1462 = vmatpush1.msra.mxu0 0.0
    %1463 = vmatprep.subr.mxu0 0.0
    %1464 = vmatpush1.msra.mxu0 0.0
    %1465 = vmatprep.subr.mxu0 0.0
    %1466 = vmatpush1.msra.mxu0 0.0
    %1467 = vmatprep.subr.mxu0 0.0
    %1468 = vmatpush1.msra.mxu0 0.0
    %1469 = vmatprep.subr.mxu0 0.0
    %1470 = vmatpush1.msra.mxu0 0.0
    %1471 = vmatprep.subr.mxu0 0.0
    %1472 = vmatpush1.msra.mxu0 0.0
    %1473 = vmatprep.subr.mxu0 0.0
    %1474 = vmatpush1.msra.mxu0 0.0
    %1475 = vmatprep.subr.mxu0 0.0
    %1476 = vmatpush1.msra.mxu0 0.0
    %1477 = vmatprep.subr.mxu0 0.0
    %1478 = vmatpush1.msra.mxu0 0.0
    %1479 = vmatprep.subr.mxu0 0.0
    %1480 = vmatpush1.msra.mxu0 0.0
    %1481 = vmatprep.subr.mxu0 0.0
    %1482 = vmatpush1.msra.mxu0 0.0
    %1483 = vmatprep.subr.mxu0 0.0
    %1484 = vmatpush1.msra.mxu0 0.0
    %1485 = vmatprep.subr.mxu0 0.0
    %1486 = vmatpush1.msra.mxu0 0.0
    %1487 = vmatprep.subr.mxu0 0.0
    %1488 = vmatpush1.msra.mxu0 0.0
    %1489 = vmatprep.subr.mxu0 0.0
    %1490 = vmatpush1.msra.mxu0 0.0
    %1491 = vmatprep.subr.mxu0 0.0
    %1492 = vmatpush1.msra.mxu0 0.0
    %1493 = vmatprep.subr.mxu0 0.0
    %1494 = vmatpush1.msra.mxu0 0.0
    %1495 = vmatprep.subr.mxu0 0.0
    %1496 = vmatpush1.msra.mxu0 0.0
    %1497 = vmatprep.subr.mxu0 0.0
    %1498 = vmatpush1.msra.mxu0 0.0
    %1499 = vmatprep.subr.mxu0 0.0
    %1500 = vmatpush1.msra.mxu0 0.0
    %1501 = vmatprep.subr.mxu0 0.0
    %1502 = vmatpush1.msra.mxu0 0.0
    %1503 = vmatprep.subr.mxu0 0.0
    %1504 = vmatpush1.msra.mxu0 0.0
    %1505 = vmatprep.subr.mxu0 0.0
    %1506 = vmatpush1.msra.mxu0 0.0
    %1507 = vmatprep.subr.mxu0 0.0
    %1508 = vmatpush1.msra.mxu0 0.0
    %1509 = vmatprep.subr.mxu0 0.0
    %1510 = vmatpush1.msra.mxu0 0.0
    %1511 = vmatprep.subr.mxu0 0.0
    %1512 = vmatpush1.msra.mxu0 0.0
    %1513 = vmatprep.subr.mxu0 0.0
    %1514 = vmatpush1.msra.mxu0 0.0
    %1515 = vmatprep.subr.mxu0 0.0
    %1516 = vmatpush1.msra.mxu0 0.0
    %1517 = vmatprep.mubr.f32.mxu0 0.0
    %1518 = vmatmul.mubr.f32.gmra.mrb[0].mxu0 %v1451
    %v1519 = vpop.f32.mrb[0].mxu0
    %v1520 = vadd.f32 0.0, %v1519
    %v1521 = vpop.f32.mrb[0].mxu0
    %1522 = vdwg.mxu0
    %1523 = vmatprep.subr.mxu0 0.0
    %1524 = vmatpush1.msra.mxu0 %v334
    %1525 = vmatprep.subr.mxu0 0.0
    %1526 = vmatpush1.msra.mxu0 %v335
    %1527 = vmatprep.subr.mxu0 0.0
    %1528 = vmatpush1.msra.mxu0 %v336
    %1529 = vmatprep.subr.mxu0 0.0
    %1530 = vmatpush1.msra.mxu0 %v337
    %1531 = vmatprep.subr.mxu0 0.0
    %1532 = vmatpush1.msra.mxu0 0.0
    %1533 = vmatprep.subr.mxu0 0.0
    %1534 = vmatpush1.msra.mxu0 0.0
    %1535 = vmatprep.subr.mxu0 0.0
    %1536 = vmatpush1.msra.mxu0 0.0
    %1537 = vmatprep.subr.mxu0 0.0
    %1538 = vmatpush1.msra.mxu0 0.0
    %1539 = vmatprep.subr.mxu0 0.0
    %1540 = vmatpush1.msra.mxu0 0.0
    %1541 = vmatprep.subr.mxu0 0.0
    %1542 = vmatpush1.msra.mxu0 0.0
    %1543 = vmatprep.subr.mxu0 0.0
    %1544 = vmatpush1.msra.mxu0 0.0
    %1545 = vmatprep.subr.mxu0 0.0
    %1546 = vmatpush1.msra.mxu0 0.0
    %1547 = vmatprep.subr.mxu0 0.0
    %1548 = vmatpush1.msra.mxu0 0.0
    %1549 = vmatprep.subr.mxu0 0.0
    %1550 = vmatpush1.msra.mxu0 0.0
    %1551 = vmatprep.subr.mxu0 0.0
    %1552 = vmatpush1.msra.mxu0 0.0
    %1553 = vmatprep.subr.mxu0 0.0
    %1554 = vmatpush1.msra.mxu0 0.0
    %1555 = vmatprep.subr.mxu0 0.0
    %1556 = vmatpush1.msra.mxu0 0.0
    %1557 = vmatprep.subr.mxu0 0.0
    %1558 = vmatpush1.msra.mxu0 0.0
    %1559 = vmatprep.subr.mxu0 0.0
    %1560 = vmatpush1.msra.mxu0 0.0
    %1561 = vmatprep.subr.mxu0 0.0
    %1562 = vmatpush1.msra.mxu0 0.0
    %1563 = vmatprep.subr.mxu0 0.0
    %1564 = vmatpush1.msra.mxu0 0.0
    %1565 = vmatprep.subr.mxu0 0.0
    %1566 = vmatpush1.msra.mxu0 0.0
    %1567 = vmatprep.subr.mxu0 0.0
    %1568 = vmatpush1.msra.mxu0 0.0
    %1569 = vmatprep.subr.mxu0 0.0
    %1570 = vmatpush1.msra.mxu0 0.0
    %1571 = vmatprep.subr.mxu0 0.0
    %1572 = vmatpush1.msra.mxu0 0.0
    %1573 = vmatprep.subr.mxu0 0.0
    %1574 = vmatpush1.msra.mxu0 0.0
    %1575 = vmatprep.subr.mxu0 0.0
    %1576 = vmatpush1.msra.mxu0 0.0
    %1577 = vmatprep.subr.mxu0 0.0
    %1578 = vmatpush1.msra.mxu0 0.0
    %1579 = vmatprep.subr.mxu0 0.0
    %1580 = vmatpush1.msra.mxu0 0.0
    %1581 = vmatprep.subr.mxu0 0.0
    %1582 = vmatpush1.msra.mxu0 0.0
    %1583 = vmatprep.subr.mxu0 0.0
    %1584 = vmatpush1.msra.mxu0 0.0
    %1585 = vmatprep.subr.mxu0 0.0
    %1586 = vmatpush1.msra.mxu0 0.0
    %1587 = vmatprep.mubr.f32.mxu0 0.0
    %1588 = vmatmul.mubr.f32.gmra.mrb[0].mxu0 %v1451
    %v1589 = vpop.f32.mrb[0].mxu0
    %v1590 = vadd.f32 0.0, %v1589
    %v1591 = vpop.f32.mrb[0].mxu0
    %1592 = vdwg.mxu0
    %1593 = vmatprep.subr.mxu0 0.0
    %1594 = vmatpush1.msra.mxu0 %v338
    %1595 = vmatprep.subr.mxu0 0.0
    %1596 = vmatpush1.msra.mxu0 %v339
    %1597 = vmatprep.subr.mxu0 0.0
    %1598 = vmatpush1.msra.mxu0 %v340
    %1599 = vmatprep.subr.mxu0 0.0
    %1600 = vmatpush1.msra.mxu0 %v341
    %1601 = vmatprep.subr.mxu0 0.0
    %1602 = vmatpush1.msra.mxu0 0.0
    %1603 = vmatprep.subr.mxu0 0.0
    %1604 = vmatpush1.msra.mxu0 0.0
    %1605 = vmatprep.subr.mxu0 0.0
    %1606 = vmatpush1.msra.mxu0 0.0
    %1607 = vmatprep.subr.mxu0 0.0
    %1608 = vmatpush1.msra.mxu0 0.0
    %1609 = vmatprep.subr.mxu0 0.0
    %1610 = vmatpush1.msra.mxu0 0.0
    %1611 = vmatprep.subr.mxu0 0.0
    %1612 = vmatpush1.msra.mxu0 0.0
    %1613 = vmatprep.subr.mxu0 0.0
    %1614 = vmatpush1.msra.mxu0 0.0
    %1615 = vmatprep.subr.mxu0 0.0
    %1616 = vmatpush1.msra.mxu0 0.0
    %1617 = vmatprep.subr.mxu0 0.0
    %1618 = vmatpush1.msra.mxu0 0.0
    %1619 = vmatprep.subr.mxu0 0.0
    %1620 = vmatpush1.msra.mxu0 0.0
    %1621 = vmatprep.subr.mxu0 0.0
    %1622 = vmatpush1.msra.mxu0 0.0
    %1623 = vmatprep.subr.mxu0 0.0
    %1624 = vmatpush1.msra.mxu0 0.0
    %1625 = vmatprep.subr.mxu0 0.0
    %1626 = vmatpush1.msra.mxu0 0.0
    %1627 = vmatprep.subr.mxu0 0.0
    %1628 = vmatpush1.msra.mxu0 0.0
    %1629 = vmatprep.subr.mxu0 0.0
    %1630 = vmatpush1.msra.mxu0 0.0
    %1631 = vmatprep.subr.mxu0 0.0
    %1632 = vmatpush1.msra.mxu0 0.0
    %1633 = vmatprep.subr.mxu0 0.0
    %1634 = vmatpush1.msra.mxu0 0.0
    %1635 = vmatprep.subr.mxu0 0.0
    %1636 = vmatpush1.msra.mxu0 0.0
    %1637 = vmatprep.subr.mxu0 0.0
    %1638 = vmatpush1.msra.mxu0 0.0
    %1639 = vmatprep.subr.mxu0 0.0
    %1640 = vmatpush1.msra.mxu0 0.0
    %1641 = vmatprep.subr.mxu0 0.0
    %1642 = vmatpush1.msra.mxu0 0.0
    %1643 = vmatprep.subr.mxu0 0.0
    %1644 = vmatpush1.msra.mxu0 0.0
    %1645 = vmatprep.subr.mxu0 0.0
    %1646 = vmatpush1.msra.mxu0 0.0
    %1647 = vmatprep.subr.mxu0 0.0
    %1648 = vmatpush1.msra.mxu0 0.0
    %1649 = vmatprep.subr.mxu0 0.0
    %1650 = vmatpush1.msra.mxu0 0.0
    %1651 = vmatprep.subr.mxu0 0.0
    %1652 = vmatpush1.msra.mxu0 0.0
    %1653 = vmatprep.subr.mxu0 0.0
    %1654 = vmatpush1.msra.mxu0 0.0
    %1655 = vmatprep.subr.mxu0 0.0
    %1656 = vmatpush1.msra.mxu0 0.0
    %1657 = vmatprep.mubr.f32.mxu0 0.0
    %1658 = vmatmul.mubr.f32.gmra.mrb[0].mxu0 %v1451
    %v1659 = vpop.f32.mrb[0].mxu0
    %v1660 = vadd.f32 %v347, %v1659
    %v1661 = vpop.f32.mrb[0].mxu0
    %1662 = vdwg.mxu0
    %v1664 = vrot.slane %v1520, 4
    %v1665 = vrot.slane %v1520, 5
    %v1668 = vadd.f32 %v151, %v1664
    %v1669 = vadd.f32 %v152, %v1665
    %v1670 = vxor.u32 %v1668, 2147483648
    %v1671 = vxor.u32 %v1669, 2147483648
    %v1672 = vmul.f32 %v1670, 1.442695
    %v1673 = vpow.pop %v1672
    %v1674 = vmul.f32 %v1671, 1.442695
    %v1675 = vpow.pop %v1674
    %v1676 = vadd.f32 %v1673, 1.0
    %v1677 = vadd.f32 %v1675, 1.0
    %v1678 = vrcp.pop %v1676
    %v1679 = vmul.f32 1.0, %v1678
    %v1680 = vrcp.pop %v1677
    %v1681 = vmul.f32 1.0, %v1680
    %v1683 = vrot.slane %v1590, 4
    %v1684 = vrot.slane %v1590, 5
    %v1687 = vadd.f32 %v244, %v1683
    %v1688 = vadd.f32 %v245, %v1684
    %v1689 = vxor.u32 %v1687, 2147483648
    %v1690 = vxor.u32 %v1688, 2147483648
    %v1691 = vmul.f32 %v1689, 1.442695
    %v1692 = vpow.pop %v1691
    %v1693 = vmul.f32 %v1690, 1.442695
    %v1694 = vpow.pop %v1693
    %v1695 = vadd.f32 %v1692, 1.0
    %v1696 = vadd.f32 %v1694, 1.0
    %v1697 = vrcp.pop %v1695
    %v1698 = vmul.f32 1.0, %v1697
    %v1699 = vrcp.pop %v1696
    %v1700 = vmul.f32 1.0, %v1699
    %v1702 = vrot.slane %v1660, 4
    %v1703 = vrot.slane %v1660, 5
    %v1706 = vmul.f32 %v1679, %v1702
    %v1707 = vmul.f32 %v1681, %v1703
    %v1708 = vadd.f32 %v322, %v1706
    %v1709 = vadd.f32 %v327, %v1707
    %v1710 = vtanh.pop %v1708
    %v1711 = vtanh.pop %v1709
    %v1712 = vsub.f32 1.0, %v1698
    %v1713 = vsub.f32 1.0, %v1700
    %v1714 = vmul.f32 %v1712, %v1710
    %v1715 = vmul.f32 %v1713, %v1711
    %v1716 = vrot.slane %v1444, 7
    %v1717 = vrot.slane %v1445, 7
    %v1720 = vmul.f32 %v1698, %v1716
    %v1721 = vmul.f32 %v1700, %v1717
    %v1722 = vadd.f32 %v1714, %v1720
    %v1723 = vadd.f32 %v1715, %v1721
    %v1726 = vrot.slane %v1722, 4
    %v1727 = vrot.slane %v1723, 3
    %v1728 = vsel %vm620, %v1727, %v1726
    %v1729 = vsel %vm349, %v1728, 0
    %1731 = vmatprep.subr.mxu0 0.0
    %1732 = vmatpush1.msra.mxu0 %v330
    %1733 = vmatprep.subr.mxu0 0.0
    %1734 = vmatpush1.msra.mxu0 %v331
    %1735 = vmatprep.subr.mxu0 0.0
    %1736 = vmatpush1.msra.mxu0 %v332
    %1737 = vmatprep.subr.mxu0 0.0
    %1738 = vmatpush1.msra.mxu0 %v333
    %1739 = vmatprep.subr.mxu0 0.0
    %1740 = vmatpush1.msra.mxu0 0.0
    %1741 = vmatprep.subr.mxu0 0.0
    %1742 = vmatpush1.msra.mxu0 0.0
    %1743 = vmatprep.subr.mxu0 0.0
    %1744 = vmatpush1.msra.mxu0 0.0
    %1745 = vmatprep.subr.mxu0 0.0
    %1746 = vmatpush1.msra.mxu0 0.0
    %1747 = vmatprep.subr.mxu0 0.0
    %1748 = vmatpush1.msra.mxu0 0.0
    %1749 = vmatprep.subr.mxu0 0.0
    %1750 = vmatpush1.msra.mxu0 0.0
    %1751 = vmatprep.subr.mxu0 0.0
    %1752 = vmatpush1.msra.mxu0 0.0
    %1753 = vmatprep.subr.mxu0 0.0
    %1754 = vmatpush1.msra.mxu0 0.0
    %1755 = vmatprep.subr.mxu0 0.0
    %1756 = vmatpush1.msra.mxu0 0.0
    %1757 = vmatprep.subr.mxu0 0.0
    %1758 = vmatpush1.msra.mxu0 0.0
    %1759 = vmatprep.subr.mxu0 0.0
    %1760 = vmatpush1.msra.mxu0 0.0
    %1761 = vmatprep.subr.mxu0 0.0
    %1762 = vmatpush1.msra.mxu0 0.0
    %1763 = vmatprep.subr.mxu0 0.0
    %1764 = vmatpush1.msra.mxu0 0.0
    %1765 = vmatprep.subr.mxu0 0.0
    %1766 = vmatpush1.msra.mxu0 0.0
    %1767 = vmatprep.subr.mxu0 0.0
    %1768 = vmatpush1.msra.mxu0 0.0
    %1769 = vmatprep.subr.mxu0 0.0
    %1770 = vmatpush1.msra.mxu0 0.0
    %1771 = vmatprep.subr.mxu0 0.0
    %1772 = vmatpush1.msra.mxu0 0.0
    %1773 = vmatprep.subr.mxu0 0.0
    %1774 = vmatpush1.msra.mxu0 0.0
    %1775 = vmatprep.subr.mxu0 0.0
    %1776 = vmatpush1.msra.mxu0 0.0
    %1777 = vmatprep.subr.mxu0 0.0
    %1778 = vmatpush1.msra.mxu0 0.0
    %1779 = vmatprep.subr.mxu0 0.0
    %1780 = vmatpush1.msra.mxu0 0.0
    %1781 = vmatprep.subr.mxu0 0.0
    %1782 = vmatpush1.msra.mxu0 0.0
    %1783 = vmatprep.subr.mxu0 0.0
    %1784 = vmatpush1.msra.mxu0 0.0
    %1785 = vmatprep.subr.mxu0 0.0
    %1786 = vmatpush1.msra.mxu0 0.0
    %1787 = vmatprep.subr.mxu0 0.0
    %1788 = vmatpush1.msra.mxu0 0.0
    %1789 = vmatprep.subr.mxu0 0.0
    %1790 = vmatpush1.msra.mxu0 0.0
    %1791 = vmatprep.subr.mxu0 0.0
    %1792 = vmatpush1.msra.mxu0 0.0
    %1793 = vmatprep.subr.mxu0 0.0
    %1794 = vmatpush1.msra.mxu0 0.0
    %1795 = vmatprep.mubr.f32.mxu0 0.0
    %1796 = vmatmul.mubr.f32.gmra.mrb[0].mxu0 %v1729
    %v1797 = vpop.f32.mrb[0].mxu0
    %v1798 = vadd.f32 0.0, %v1797
    %v1799 = vpop.f32.mrb[0].mxu0
    %1800 = vdwg.mxu0
    %1801 = vmatprep.subr.mxu0 0.0
    %1802 = vmatpush1.msra.mxu0 %v334
    %1803 = vmatprep.subr.mxu0 0.0
    %1804 = vmatpush1.msra.mxu0 %v335
    %1805 = vmatprep.subr.mxu0 0.0
    %1806 = vmatpush1.msra.mxu0 %v336
    %1807 = vmatprep.subr.mxu0 0.0
    %1808 = vmatpush1.msra.mxu0 %v337
    %1809 = vmatprep.subr.mxu0 0.0
    %1810 = vmatpush1.msra.mxu0 0.0
    %1811 = vmatprep.subr.mxu0 0.0
    %1812 = vmatpush1.msra.mxu0 0.0
    %1813 = vmatprep.subr.mxu0 0.0
    %1814 = vmatpush1.msra.mxu0 0.0
    %1815 = vmatprep.subr.mxu0 0.0
    %1816 = vmatpush1.msra.mxu0 0.0
    %1817 = vmatprep.subr.mxu0 0.0
    %1818 = vmatpush1.msra.mxu0 0.0
    %1819 = vmatprep.subr.mxu0 0.0
    %1820 = vmatpush1.msra.mxu0 0.0
    %1821 = vmatprep.subr.mxu0 0.0
    %1822 = vmatpush1.msra.mxu0 0.0
    %1823 = vmatprep.subr.mxu0 0.0
    %1824 = vmatpush1.msra.mxu0 0.0
    %1825 = vmatprep.subr.mxu0 0.0
    %1826 = vmatpush1.msra.mxu0 0.0
    %1827 = vmatprep.subr.mxu0 0.0
    %1828 = vmatpush1.msra.mxu0 0.0
    %1829 = vmatprep.subr.mxu0 0.0
    %1830 = vmatpush1.msra.mxu0 0.0
    %1831 = vmatprep.subr.mxu0 0.0
    %1832 = vmatpush1.msra.mxu0 0.0
    %1833 = vmatprep.subr.mxu0 0.0
    %1834 = vmatpush1.msra.mxu0 0.0
    %1835 = vmatprep.subr.mxu0 0.0
    %1836 = vmatpush1.msra.mxu0 0.0
    %1837 = vmatprep.subr.mxu0 0.0
    %1838 = vmatpush1.msra.mxu0 0.0
    %1839 = vmatprep.subr.mxu0 0.0
    %1840 = vmatpush1.msra.mxu0 0.0
    %1841 = vmatprep.subr.mxu0 0.0
    %1842 = vmatpush1.msra.mxu0 0.0
    %1843 = vmatprep.subr.mxu0 0.0
    %1844 = vmatpush1.msra.mxu0 0.0
    %1845 = vmatprep.subr.mxu0 0.0
    %1846 = vmatpush1.msra.mxu0 0.0
    %1847 = vmatprep.subr.mxu0 0.0
    %1848 = vmatpush1.msra.mxu0 0.0
    %1849 = vmatprep.subr.mxu0 0.0
    %1850 = vmatpush1.msra.mxu0 0.0
    %1851 = vmatprep.subr.mxu0 0.0
    %1852 = vmatpush1.msra.mxu0 0.0
    %1853 = vmatprep.subr.mxu0 0.0
    %1854 = vmatpush1.msra.mxu0 0.0
    %1855 = vmatprep.subr.mxu0 0.0
    %1856 = vmatpush1.msra.mxu0 0.0
    %1857 = vmatprep.subr.mxu0 0.0
    %1858 = vmatpush1.msra.mxu0 0.0
    %1859 = vmatprep.subr.mxu0 0.0
    %1860 = vmatpush1.msra.mxu0 0.0
    %1861 = vmatprep.subr.mxu0 0.0
    %1862 = vmatpush1.msra.mxu0 0.0
    %1863 = vmatprep.subr.mxu0 0.0
    %1864 = vmatpush1.msra.mxu0 0.0
    %1865 = vmatprep.mubr.f32.mxu0 0.0
    %1866 = vmatmul.mubr.f32.gmra.mrb[0].mxu0 %v1729
    %v1867 = vpop.f32.mrb[0].mxu0
    %v1868 = vadd.f32 0.0, %v1867
    %v1869 = vpop.f32.mrb[0].mxu0
    %1870 = vdwg.mxu0
    %1871 = vmatprep.subr.mxu0 0.0
    %1872 = vmatpush1.msra.mxu0 %v338
    %1873 = vmatprep.subr.mxu0 0.0
    %1874 = vmatpush1.msra.mxu0 %v339
    %1875 = vmatprep.subr.mxu0 0.0
    %1876 = vmatpush1.msra.mxu0 %v340
    %1877 = vmatprep.subr.mxu0 0.0
    %1878 = vmatpush1.msra.mxu0 %v341
    %1879 = vmatprep.subr.mxu0 0.0
    %1880 = vmatpush1.msra.mxu0 0.0
    %1881 = vmatprep.subr.mxu0 0.0
    %1882 = vmatpush1.msra.mxu0 0.0
    %1883 = vmatprep.subr.mxu0 0.0
    %1884 = vmatpush1.msra.mxu0 0.0
    %1885 = vmatprep.subr.mxu0 0.0
    %1886 = vmatpush1.msra.mxu0 0.0
    %1887 = vmatprep.subr.mxu0 0.0
    %1888 = vmatpush1.msra.mxu0 0.0
    %1889 = vmatprep.subr.mxu0 0.0
    %1890 = vmatpush1.msra.mxu0 0.0
    %1891 = vmatprep.subr.mxu0 0.0
    %1892 = vmatpush1.msra.mxu0 0.0
    %1893 = vmatprep.subr.mxu0 0.0
    %1894 = vmatpush1.msra.mxu0 0.0
    %1895 = vmatprep.subr.mxu0 0.0
    %1896 = vmatpush1.msra.mxu0 0.0
    %1897 = vmatprep.subr.mxu0 0.0
    %1898 = vmatpush1.msra.mxu0 0.0
    %1899 = vmatprep.subr.mxu0 0.0
    %1900 = vmatpush1.msra.mxu0 0.0
    %1901 = vmatprep.subr.mxu0 0.0
    %1902 = vmatpush1.msra.mxu0 0.0
    %1903 = vmatprep.subr.mxu0 0.0
    %1904 = vmatpush1.msra.mxu0 0.0
    %1905 = vmatprep.subr.mxu0 0.0
    %1906 = vmatpush1.msra.mxu0 0.0
    %1907 = vmatprep.subr.mxu0 0.0
    %1908 = vmatpush1.msra.mxu0 0.0
    %1909 = vmatprep.subr.mxu0 0.0
    %1910 = vmatpush1.msra.mxu0 0.0
    %1911 = vmatprep.subr.mxu0 0.0
    %1912 = vmatpush1.msra.mxu0 0.0
    %1913 = vmatprep.subr.mxu0 0.0
    %1914 = vmatpush1.msra.mxu0 0.0
    %1915 = vmatprep.subr.mxu0 0.0
    %1916 = vmatpush1.msra.mxu0 0.0
    %1917 = vmatprep.subr.mxu0 0.0
    %1918 = vmatpush1.msra.mxu0 0.0
    %1919 = vmatprep.subr.mxu0 0.0
    %1920 = vmatpush1.msra.mxu0 0.0
    %1921 = vmatprep.subr.mxu0 0.0
    %1922 = vmatpush1.msra.mxu0 0.0
    %1923 = vmatprep.subr.mxu0 0.0
    %1924 = vmatpush1.msra.mxu0 0.0
    %1925 = vmatprep.subr.mxu0 0.0
    %1926 = vmatpush1.msra.mxu0 0.0
    %1927 = vmatprep.subr.mxu0 0.0
    %1928 = vmatpush1.msra.mxu0 0.0
    %1929 = vmatprep.subr.mxu0 0.0
    %1930 = vmatpush1.msra.mxu0 0.0
    %1931 = vmatprep.subr.mxu0 0.0
    %1932 = vmatpush1.msra.mxu0 0.0
    %1933 = vmatprep.subr.mxu0 0.0
    %1934 = vmatpush1.msra.mxu0 0.0
    %1935 = vmatprep.mubr.f32.mxu0 0.0
    %1936 = vmatmul.mubr.f32.gmra.mrb[0].mxu0 %v1729
    %v1937 = vpop.f32.mrb[0].mxu0
    %v1938 = vadd.f32 %v347, %v1937
    %v1939 = vpop.f32.mrb[0].mxu0
    %1940 = vdwg.mxu0
    %v1942 = vrot.slane %v1798, 3
    %v1943 = vrot.slane %v1798, 4
    %v1946 = vadd.f32 %v151, %v1942
    %v1947 = vadd.f32 %v152, %v1943
    %v1948 = vxor.u32 %v1946, 2147483648
    %v1949 = vxor.u32 %v1947, 2147483648
    %v1950 = vmul.f32 %v1948, 1.442695
    %v1951 = vpow.pop %v1950
    %v1952 = vmul.f32 %v1949, 1.442695
    %v1953 = vpow.pop %v1952
    %v1954 = vadd.f32 %v1951, 1.0
    %v1955 = vadd.f32 %v1953, 1.0
    %v1956 = vrcp.pop %v1954
    %v1957 = vmul.f32 1.0, %v1956
    %v1958 = vrcp.pop %v1955
    %v1959 = vmul.f32 1.0, %v1958
    %v1961 = vrot.slane %v1868, 3
    %v1962 = vrot.slane %v1868, 4
    %v1965 = vadd.f32 %v244, %v1961
    %v1966 = vadd.f32 %v245, %v1962
    %v1967 = vxor.u32 %v1965, 2147483648
    %v1968 = vxor.u32 %v1966, 2147483648
    %v1969 = vmul.f32 %v1967, 1.442695
    %v1970 = vpow.pop %v1969
    %v1971 = vmul.f32 %v1968, 1.442695
    %v1972 = vpow.pop %v1971
    %v1973 = vadd.f32 %v1970, 1.0
    %v1974 = vadd.f32 %v1972, 1.0
    %v1975 = vrcp.pop %v1973
    %v1976 = vmul.f32 1.0, %v1975
    %v1977 = vrcp.pop %v1974
    %v1978 = vmul.f32 1.0, %v1977
    %v1980 = vrot.slane %v1938, 3
    %v1981 = vrot.slane %v1938, 4
    %v1984 = vmul.f32 %v1957, %v1980
    %v1985 = vmul.f32 %v1959, %v1981
    %v1986 = vadd.f32 %v322, %v1984
    %v1987 = vadd.f32 %v327, %v1985
    %v1988 = vtanh.pop %v1986
    %v1989 = vtanh.pop %v1987
    %v1990 = vsub.f32 1.0, %v1976
    %v1991 = vsub.f32 1.0, %v1978
    %v1992 = vmul.f32 %v1990, %v1988
    %v1993 = vmul.f32 %v1991, %v1989
    %v1994 = vrot.slane %v1722, 7
    %v1995 = vrot.slane %v1723, 7
    %v1998 = vmul.f32 %v1976, %v1994
    %v1999 = vmul.f32 %v1978, %v1995
    %v2000 = vadd.f32 %v1992, %v1998
    %v2001 = vadd.f32 %v1993, %v1999
    %v2004 = vrot.slane %v2000, 5
    %v2005 = vrot.slane %v2001, 4
    %v2006 = vsel %vm620, %v2005, %v2004
    %v2007 = vsel %vm349, %v2006, 0
    %2009 = vmatprep.subr.mxu0 0.0
    %2010 = vmatpush1.msra.mxu0 %v330
    %2011 = vmatprep.subr.mxu0 0.0
    %2012 = vmatpush1.msra.mxu0 %v331
    %2013 = vmatprep.subr.mxu0 0.0
    %2014 = vmatpush1.msra.mxu0 %v332
    %2015 = vmatprep.subr.mxu0 0.0
    %2016 = vmatpush1.msra.mxu0 %v333
    %2017 = vmatprep.subr.mxu0 0.0
    %2018 = vmatpush1.msra.mxu0 0.0
    %2019 = vmatprep.subr.mxu0 0.0
    %2020 = vmatpush1.msra.mxu0 0.0
    %2021 = vmatprep.subr.mxu0 0.0
    %2022 = vmatpush1.msra.mxu0 0.0
    %2023 = vmatprep.subr.mxu0 0.0
    %2024 = vmatpush1.msra.mxu0 0.0
    %2025 = vmatprep.subr.mxu0 0.0
    %2026 = vmatpush1.msra.mxu0 0.0
    %2027 = vmatprep.subr.mxu0 0.0
    %2028 = vmatpush1.msra.mxu0 0.0
    %2029 = vmatprep.subr.mxu0 0.0
    %2030 = vmatpush1.msra.mxu0 0.0
    %2031 = vmatprep.subr.mxu0 0.0
    %2032 = vmatpush1.msra.mxu0 0.0
    %2033 = vmatprep.subr.mxu0 0.0
    %2034 = vmatpush1.msra.mxu0 0.0
    %2035 = vmatprep.subr.mxu0 0.0
    %2036 = vmatpush1.msra.mxu0 0.0
    %2037 = vmatprep.subr.mxu0 0.0
    %2038 = vmatpush1.msra.mxu0 0.0
    %2039 = vmatprep.subr.mxu0 0.0
    %2040 = vmatpush1.msra.mxu0 0.0
    %2041 = vmatprep.subr.mxu0 0.0
    %2042 = vmatpush1.msra.mxu0 0.0
    %2043 = vmatprep.subr.mxu0 0.0
    %2044 = vmatpush1.msra.mxu0 0.0
    %2045 = vmatprep.subr.mxu0 0.0
    %2046 = vmatpush1.msra.mxu0 0.0
    %2047 = vmatprep.subr.mxu0 0.0
    %2048 = vmatpush1.msra.mxu0 0.0
    %2049 = vmatprep.subr.mxu0 0.0
    %2050 = vmatpush1.msra.mxu0 0.0
    %2051 = vmatprep.subr.mxu0 0.0
    %2052 = vmatpush1.msra.mxu0 0.0
    %2053 = vmatprep.subr.mxu0 0.0
    %2054 = vmatpush1.msra.mxu0 0.0
    %2055 = vmatprep.subr.mxu0 0.0
    %2056 = vmatpush1.msra.mxu0 0.0
    %2057 = vmatprep.subr.mxu0 0.0
    %2058 = vmatpush1.msra.mxu0 0.0
    %2059 = vmatprep.subr.mxu0 0.0
    %2060 = vmatpush1.msra.mxu0 0.0
    %2061 = vmatprep.subr.mxu0 0.0
    %2062 = vmatpush1.msra.mxu0 0.0
    %2063 = vmatprep.subr.mxu0 0.0
    %2064 = vmatpush1.msra.mxu0 0.0
    %2065 = vmatprep.subr.mxu0 0.0
    %2066 = vmatpush1.msra.mxu0 0.0
    %2067 = vmatprep.subr.mxu0 0.0
    %2068 = vmatpush1.msra.mxu0 0.0
    %2069 = vmatprep.subr.mxu0 0.0
    %2070 = vmatpush1.msra.mxu0 0.0
    %2071 = vmatprep.subr.mxu0 0.0
    %2072 = vmatpush1.msra.mxu0 0.0
    %2073 = vmatprep.mubr.f32.mxu0 0.0
    %2074 = vmatmul.mubr.f32.gmra.mrb[0].mxu0 %v2007
    %v2075 = vpop.f32.mrb[0].mxu0
    %v2076 = vadd.f32 0.0, %v2075
    %v2077 = vpop.f32.mrb[0].mxu0
    %2078 = vdwg.mxu0
    %2079 = vmatprep.subr.mxu0 0.0
    %2080 = vmatpush1.msra.mxu0 %v334
    %2081 = vmatprep.subr.mxu0 0.0
    %2082 = vmatpush1.msra.mxu0 %v335
    %2083 = vmatprep.subr.mxu0 0.0
    %2084 = vmatpush1.msra.mxu0 %v336
    %2085 = vmatprep.subr.mxu0 0.0
    %2086 = vmatpush1.msra.mxu0 %v337
    %2087 = vmatprep.subr.mxu0 0.0
    %2088 = vmatpush1.msra.mxu0 0.0
    %2089 = vmatprep.subr.mxu0 0.0
    %2090 = vmatpush1.msra.mxu0 0.0
    %2091 = vmatprep.subr.mxu0 0.0
    %2092 = vmatpush1.msra.mxu0 0.0
    %2093 = vmatprep.subr.mxu0 0.0
    %2094 = vmatpush1.msra.mxu0 0.0
    %2095 = vmatprep.subr.mxu0 0.0
    %2096 = vmatpush1.msra.mxu0 0.0
    %2097 = vmatprep.subr.mxu0 0.0
    %2098 = vmatpush1.msra.mxu0 0.0
    %2099 = vmatprep.subr.mxu0 0.0
    %2100 = vmatpush1.msra.mxu0 0.0
    %2101 = vmatprep.subr.mxu0 0.0
    %2102 = vmatpush1.msra.mxu0 0.0
    %2103 = vmatprep.subr.mxu0 0.0
    %2104 = vmatpush1.msra.mxu0 0.0
    %2105 = vmatprep.subr.mxu0 0.0
    %2106 = vmatpush1.msra.mxu0 0.0
    %2107 = vmatprep.subr.mxu0 0.0
    %2108 = vmatpush1.msra.mxu0 0.0
    %2109 = vmatprep.subr.mxu0 0.0
    %2110 = vmatpush1.msra.mxu0 0.0
    %2111 = vmatprep.subr.mxu0 0.0
    %2112 = vmatpush1.msra.mxu0 0.0
    %2113 = vmatprep.subr.mxu0 0.0
    %2114 = vmatpush1.msra.mxu0 0.0
    %2115 = vmatprep.subr.mxu0 0.0
    %2116 = vmatpush1.msra.mxu0 0.0
    %2117 = vmatprep.subr.mxu0 0.0
    %2118 = vmatpush1.msra.mxu0 0.0
    %2119 = vmatprep.subr.mxu0 0.0
    %2120 = vmatpush1.msra.mxu0 0.0
    %2121 = vmatprep.subr.mxu0 0.0
    %2122 = vmatpush1.msra.mxu0 0.0
    %2123 = vmatprep.subr.mxu0 0.0
    %2124 = vmatpush1.msra.mxu0 0.0
    %2125 = vmatprep.subr.mxu0 0.0
    %2126 = vmatpush1.msra.mxu0 0.0
    %2127 = vmatprep.subr.mxu0 0.0
    %2128 = vmatpush1.msra.mxu0 0.0
    %2129 = vmatprep.subr.mxu0 0.0
    %2130 = vmatpush1.msra.mxu0 0.0
    %2131 = vmatprep.subr.mxu0 0.0
    %2132 = vmatpush1.msra.mxu0 0.0
    %2133 = vmatprep.subr.mxu0 0.0
    %2134 = vmatpush1.msra.mxu0 0.0
    %2135 = vmatprep.subr.mxu0 0.0
    %2136 = vmatpush1.msra.mxu0 0.0
    %2137 = vmatprep.subr.mxu0 0.0
    %2138 = vmatpush1.msra.mxu0 0.0
    %2139 = vmatprep.subr.mxu0 0.0
    %2140 = vmatpush1.msra.mxu0 0.0
    %2141 = vmatprep.subr.mxu0 0.0
    %2142 = vmatpush1.msra.mxu0 0.0
    %2143 = vmatprep.mubr.f32.mxu0 0.0
    %2144 = vmatmul.mubr.f32.gmra.mrb[0].mxu0 %v2007
    %v2145 = vpop.f32.mrb[0].mxu0
    %v2146 = vadd.f32 0.0, %v2145
    %v2147 = vpop.f32.mrb[0].mxu0
    %2148 = vdwg.mxu0
    %2149 = vmatprep.subr.mxu0 0.0
    %2150 = vmatpush1.msra.mxu0 %v338
    %2151 = vmatprep.subr.mxu0 0.0
    %2152 = vmatpush1.msra.mxu0 %v339
    %2153 = vmatprep.subr.mxu0 0.0
    %2154 = vmatpush1.msra.mxu0 %v340
    %2155 = vmatprep.subr.mxu0 0.0
    %2156 = vmatpush1.msra.mxu0 %v341
    %2157 = vmatprep.subr.mxu0 0.0
    %2158 = vmatpush1.msra.mxu0 0.0
    %2159 = vmatprep.subr.mxu0 0.0
    %2160 = vmatpush1.msra.mxu0 0.0
    %2161 = vmatprep.subr.mxu0 0.0
    %2162 = vmatpush1.msra.mxu0 0.0
    %2163 = vmatprep.subr.mxu0 0.0
    %2164 = vmatpush1.msra.mxu0 0.0
    %2165 = vmatprep.subr.mxu0 0.0
    %2166 = vmatpush1.msra.mxu0 0.0
    %2167 = vmatprep.subr.mxu0 0.0
    %2168 = vmatpush1.msra.mxu0 0.0
    %2169 = vmatprep.subr.mxu0 0.0
    %2170 = vmatpush1.msra.mxu0 0.0
    %2171 = vmatprep.subr.mxu0 0.0
    %2172 = vmatpush1.msra.mxu0 0.0
    %2173 = vmatprep.subr.mxu0 0.0
    %2174 = vmatpush1.msra.mxu0 0.0
    %2175 = vmatprep.subr.mxu0 0.0
    %2176 = vmatpush1.msra.mxu0 0.0
    %2177 = vmatprep.subr.mxu0 0.0
    %2178 = vmatpush1.msra.mxu0 0.0
    %2179 = vmatprep.subr.mxu0 0.0
    %2180 = vmatpush1.msra.mxu0 0.0
    %2181 = vmatprep.subr.mxu0 0.0
    %2182 = vmatpush1.msra.mxu0 0.0
    %2183 = vmatprep.subr.mxu0 0.0
    %2184 = vmatpush1.msra.mxu0 0.0
    %2185 = vmatprep.subr.mxu0 0.0
    %2186 = vmatpush1.msra.mxu0 0.0
    %2187 = vmatprep.subr.mxu0 0.0
    %2188 = vmatpush1.msra.mxu0 0.0
    %2189 = vmatprep.subr.mxu0 0.0
    %2190 = vmatpush1.msra.mxu0 0.0
    %2191 = vmatprep.subr.mxu0 0.0
    %2192 = vmatpush1.msra.mxu0 0.0
    %2193 = vmatprep.subr.mxu0 0.0
    %2194 = vmatpush1.msra.mxu0 0.0
    %2195 = vmatprep.subr.mxu0 0.0
    %2196 = vmatpush1.msra.mxu0 0.0
    %2197 = vmatprep.subr.mxu0 0.0
    %2198 = vmatpush1.msra.mxu0 0.0
    %2199 = vmatprep.subr.mxu0 0.0
    %2200 = vmatpush1.msra.mxu0 0.0
    %2201 = vmatprep.subr.mxu0 0.0
    %2202 = vmatpush1.msra.mxu0 0.0
    %2203 = vmatprep.subr.mxu0 0.0
    %2204 = vmatpush1.msra.mxu0 0.0
    %2205 = vmatprep.subr.mxu0 0.0
    %2206 = vmatpush1.msra.mxu0 0.0
    %2207 = vmatprep.subr.mxu0 0.0
    %2208 = vmatpush1.msra.mxu0 0.0
    %2209 = vmatprep.subr.mxu0 0.0
    %2210 = vmatpush1.msra.mxu0 0.0
    %2211 = vmatprep.subr.mxu0 0.0
    %2212 = vmatpush1.msra.mxu0 0.0
    %2213 = vmatprep.mubr.f32.mxu0 0.0
    %2214 = vmatmul.mubr.f32.gmra.mrb[0].mxu0 %v2007
    %v2215 = vpop.f32.mrb[0].mxu0
    %v2216 = vadd.f32 %v347, %v2215
    %v2217 = vpop.f32.mrb[0].mxu0
    %2218 = vdwg.mxu0
    %v2220 = vrot.slane %v2076, 2
    %v2221 = vrot.slane %v2076, 3
    %v2224 = vadd.f32 %v151, %v2220
    %v2225 = vadd.f32 %v152, %v2221
    %v2226 = vxor.u32 %v2224, 2147483648
    %v2227 = vxor.u32 %v2225, 2147483648
    %v2228 = vmul.f32 %v2226, 1.442695
    %v2229 = vpow.pop %v2228
    %v2230 = vmul.f32 %v2227, 1.442695
    %v2231 = vpow.pop %v2230
    %v2232 = vadd.f32 %v2229, 1.0
    %v2233 = vadd.f32 %v2231, 1.0
    %v2234 = vrcp.pop %v2232
    %v2235 = vmul.f32 1.0, %v2234
    %v2236 = vrcp.pop %v2233
    %v2237 = vmul.f32 1.0, %v2236
    %v2239 = vrot.slane %v2146, 2
    %v2240 = vrot.slane %v2146, 3
    %v2243 = vadd.f32 %v244, %v2239
    %v2244 = vadd.f32 %v245, %v2240
    %v2245 = vxor.u32 %v2243, 2147483648
    %v2246 = vxor.u32 %v2244, 2147483648
    %v2247 = vmul.f32 %v2245, 1.442695
    %v2248 = vpow.pop %v2247
    %v2249 = vmul.f32 %v2246, 1.442695
    %v2250 = vpow.pop %v2249
    %v2251 = vadd.f32 %v2248, 1.0
    %v2252 = vadd.f32 %v2250, 1.0
    %v2253 = vrcp.pop %v2251
    %v2254 = vmul.f32 1.0, %v2253
    %v2255 = vrcp.pop %v2252
    %v2256 = vmul.f32 1.0, %v2255
    %v2258 = vrot.slane %v2216, 2
    %v2259 = vrot.slane %v2216, 3
    %v2262 = vmul.f32 %v2235, %v2258
    %v2263 = vmul.f32 %v2237, %v2259
    %v2264 = vadd.f32 %v322, %v2262
    %v2265 = vadd.f32 %v327, %v2263
    %v2266 = vtanh.pop %v2264
    %v2267 = vtanh.pop %v2265
    %v2268 = vsub.f32 1.0, %v2254
    %v2269 = vsub.f32 1.0, %v2256
    %v2270 = vmul.f32 %v2268, %v2266
    %v2271 = vmul.f32 %v2269, %v2267
    %v2272 = vrot.slane %v2000, 7
    %v2273 = vrot.slane %v2001, 7
    %v2276 = vmul.f32 %v2254, %v2272
    %v2277 = vmul.f32 %v2256, %v2273
    %v2278 = vadd.f32 %v2270, %v2276
    %v2279 = vadd.f32 %v2271, %v2277
    %v2282 = vrot.slane %v2278, 6
    %v2283 = vrot.slane %v2279, 5
    %v2284 = vsel %vm620, %v2283, %v2282
    %v2285 = vsel %vm349, %v2284, 0
    %2287 = vmatprep.subr.mxu0 0.0
    %2288 = vmatpush1.msra.mxu0 %v330
    %2289 = vmatprep.subr.mxu0 0.0
    %2290 = vmatpush1.msra.mxu0 %v331
    %2291 = vmatprep.subr.mxu0 0.0
    %2292 = vmatpush1.msra.mxu0 %v332
    %2293 = vmatprep.subr.mxu0 0.0
    %2294 = vmatpush1.msra.mxu0 %v333
    %2295 = vmatprep.subr.mxu0 0.0
    %2296 = vmatpush1.msra.mxu0 0.0
    %2297 = vmatprep.subr.mxu0 0.0
    %2298 = vmatpush1.msra.mxu0 0.0
    %2299 = vmatprep.subr.mxu0 0.0
    %2300 = vmatpush1.msra.mxu0 0.0
    %2301 = vmatprep.subr.mxu0 0.0
    %2302 = vmatpush1.msra.mxu0 0.0
    %2303 = vmatprep.subr.mxu0 0.0
    %2304 = vmatpush1.msra.mxu0 0.0
    %2305 = vmatprep.subr.mxu0 0.0
    %2306 = vmatpush1.msra.mxu0 0.0
    %2307 = vmatprep.subr.mxu0 0.0
    %2308 = vmatpush1.msra.mxu0 0.0
    %2309 = vmatprep.subr.mxu0 0.0
    %2310 = vmatpush1.msra.mxu0 0.0
    %2311 = vmatprep.subr.mxu0 0.0
    %2312 = vmatpush1.msra.mxu0 0.0
    %2313 = vmatprep.subr.mxu0 0.0
    %2314 = vmatpush1.msra.mxu0 0.0
    %2315 = vmatprep.subr.mxu0 0.0
    %2316 = vmatpush1.msra.mxu0 0.0
    %2317 = vmatprep.subr.mxu0 0.0
    %2318 = vmatpush1.msra.mxu0 0.0
    %2319 = vmatprep.subr.mxu0 0.0
    %2320 = vmatpush1.msra.mxu0 0.0
    %2321 = vmatprep.subr.mxu0 0.0
    %2322 = vmatpush1.msra.mxu0 0.0
    %2323 = vmatprep.subr.mxu0 0.0
    %2324 = vmatpush1.msra.mxu0 0.0
    %2325 = vmatprep.subr.mxu0 0.0
    %2326 = vmatpush1.msra.mxu0 0.0
    %2327 = vmatprep.subr.mxu0 0.0
    %2328 = vmatpush1.msra.mxu0 0.0
    %2329 = vmatprep.subr.mxu0 0.0
    %2330 = vmatpush1.msra.mxu0 0.0
    %2331 = vmatprep.subr.mxu0 0.0
    %2332 = vmatpush1.msra.mxu0 0.0
    %2333 = vmatprep.subr.mxu0 0.0
    %2334 = vmatpush1.msra.mxu0 0.0
    %2335 = vmatprep.subr.mxu0 0.0
    %2336 = vmatpush1.msra.mxu0 0.0
    %2337 = vmatprep.subr.mxu0 0.0
    %2338 = vmatpush1.msra.mxu0 0.0
    %2339 = vmatprep.subr.mxu0 0.0
    %2340 = vmatpush1.msra.mxu0 0.0
    %2341 = vmatprep.subr.mxu0 0.0
    %2342 = vmatpush1.msra.mxu0 0.0
    %2343 = vmatprep.subr.mxu0 0.0
    %2344 = vmatpush1.msra.mxu0 0.0
    %2345 = vmatprep.subr.mxu0 0.0
    %2346 = vmatpush1.msra.mxu0 0.0
    %2347 = vmatprep.subr.mxu0 0.0
    %2348 = vmatpush1.msra.mxu0 0.0
    %2349 = vmatprep.subr.mxu0 0.0
    %2350 = vmatpush1.msra.mxu0 0.0
    %2351 = vmatprep.mubr.f32.mxu0 0.0
    %2352 = vmatmul.mubr.f32.gmra.mrb[0].mxu0 %v2285
    %v2353 = vpop.f32.mrb[0].mxu0
    %v2354 = vadd.f32 0.0, %v2353
    %v2355 = vpop.f32.mrb[0].mxu0
    %2356 = vdwg.mxu0
    %2357 = vmatprep.subr.mxu0 0.0
    %2358 = vmatpush1.msra.mxu0 %v334
    %2359 = vmatprep.subr.mxu0 0.0
    %2360 = vmatpush1.msra.mxu0 %v335
    %2361 = vmatprep.subr.mxu0 0.0
    %2362 = vmatpush1.msra.mxu0 %v336
    %2363 = vmatprep.subr.mxu0 0.0
    %2364 = vmatpush1.msra.mxu0 %v337
    %2365 = vmatprep.subr.mxu0 0.0
    %2366 = vmatpush1.msra.mxu0 0.0
    %2367 = vmatprep.subr.mxu0 0.0
    %2368 = vmatpush1.msra.mxu0 0.0
    %2369 = vmatprep.subr.mxu0 0.0
    %2370 = vmatpush1.msra.mxu0 0.0
    %2371 = vmatprep.subr.mxu0 0.0
    %2372 = vmatpush1.msra.mxu0 0.0
    %2373 = vmatprep.subr.mxu0 0.0
    %2374 = vmatpush1.msra.mxu0 0.0
    %2375 = vmatprep.subr.mxu0 0.0
    %2376 = vmatpush1.msra.mxu0 0.0
    %2377 = vmatprep.subr.mxu0 0.0
    %2378 = vmatpush1.msra.mxu0 0.0
    %2379 = vmatprep.subr.mxu0 0.0
    %2380 = vmatpush1.msra.mxu0 0.0
    %2381 = vmatprep.subr.mxu0 0.0
    %2382 = vmatpush1.msra.mxu0 0.0
    %2383 = vmatprep.subr.mxu0 0.0
    %2384 = vmatpush1.msra.mxu0 0.0
    %2385 = vmatprep.subr.mxu0 0.0
    %2386 = vmatpush1.msra.mxu0 0.0
    %2387 = vmatprep.subr.mxu0 0.0
    %2388 = vmatpush1.msra.mxu0 0.0
    %2389 = vmatprep.subr.mxu0 0.0
    %2390 = vmatpush1.msra.mxu0 0.0
    %2391 = vmatprep.subr.mxu0 0.0
    %2392 = vmatpush1.msra.mxu0 0.0
    %2393 = vmatprep.subr.mxu0 0.0
    %2394 = vmatpush1.msra.mxu0 0.0
    %2395 = vmatprep.subr.mxu0 0.0
    %2396 = vmatpush1.msra.mxu0 0.0
    %2397 = vmatprep.subr.mxu0 0.0
    %2398 = vmatpush1.msra.mxu0 0.0
    %2399 = vmatprep.subr.mxu0 0.0
    %2400 = vmatpush1.msra.mxu0 0.0
    %2401 = vmatprep.subr.mxu0 0.0
    %2402 = vmatpush1.msra.mxu0 0.0
    %2403 = vmatprep.subr.mxu0 0.0
    %2404 = vmatpush1.msra.mxu0 0.0
    %2405 = vmatprep.subr.mxu0 0.0
    %2406 = vmatpush1.msra.mxu0 0.0
    %2407 = vmatprep.subr.mxu0 0.0
    %2408 = vmatpush1.msra.mxu0 0.0
    %2409 = vmatprep.subr.mxu0 0.0
    %2410 = vmatpush1.msra.mxu0 0.0
    %2411 = vmatprep.subr.mxu0 0.0
    %2412 = vmatpush1.msra.mxu0 0.0
    %2413 = vmatprep.subr.mxu0 0.0
    %2414 = vmatpush1.msra.mxu0 0.0
    %2415 = vmatprep.subr.mxu0 0.0
    %2416 = vmatpush1.msra.mxu0 0.0
    %2417 = vmatprep.subr.mxu0 0.0
    %2418 = vmatpush1.msra.mxu0 0.0
    %2419 = vmatprep.subr.mxu0 0.0
    %2420 = vmatpush1.msra.mxu0 0.0
    %2421 = vmatprep.mubr.f32.mxu0 0.0
    %2422 = vmatmul.mubr.f32.gmra.mrb[0].mxu0 %v2285
    %v2423 = vpop.f32.mrb[0].mxu0
    %v2424 = vadd.f32 0.0, %v2423
    %v2425 = vpop.f32.mrb[0].mxu0
    %2426 = vdwg.mxu0
    %2427 = vmatprep.subr.mxu0 0.0
    %2428 = vmatpush1.msra.mxu0 %v338
    %2429 = vmatprep.subr.mxu0 0.0
    %2430 = vmatpush1.msra.mxu0 %v339
    %2431 = vmatprep.subr.mxu0 0.0
    %2432 = vmatpush1.msra.mxu0 %v340
    %2433 = vmatprep.subr.mxu0 0.0
    %2434 = vmatpush1.msra.mxu0 %v341
    %2435 = vmatprep.subr.mxu0 0.0
    %2436 = vmatpush1.msra.mxu0 0.0
    %2437 = vmatprep.subr.mxu0 0.0
    %2438 = vmatpush1.msra.mxu0 0.0
    %2439 = vmatprep.subr.mxu0 0.0
    %2440 = vmatpush1.msra.mxu0 0.0
    %2441 = vmatprep.subr.mxu0 0.0
    %2442 = vmatpush1.msra.mxu0 0.0
    %2443 = vmatprep.subr.mxu0 0.0
    %2444 = vmatpush1.msra.mxu0 0.0
    %2445 = vmatprep.subr.mxu0 0.0
    %2446 = vmatpush1.msra.mxu0 0.0
    %2447 = vmatprep.subr.mxu0 0.0
    %2448 = vmatpush1.msra.mxu0 0.0
    %2449 = vmatprep.subr.mxu0 0.0
    %2450 = vmatpush1.msra.mxu0 0.0
    %2451 = vmatprep.subr.mxu0 0.0
    %2452 = vmatpush1.msra.mxu0 0.0
    %2453 = vmatprep.subr.mxu0 0.0
    %2454 = vmatpush1.msra.mxu0 0.0
    %2455 = vmatprep.subr.mxu0 0.0
    %2456 = vmatpush1.msra.mxu0 0.0
    %2457 = vmatprep.subr.mxu0 0.0
    %2458 = vmatpush1.msra.mxu0 0.0
    %2459 = vmatprep.subr.mxu0 0.0
    %2460 = vmatpush1.msra.mxu0 0.0
    %2461 = vmatprep.subr.mxu0 0.0
    %2462 = vmatpush1.msra.mxu0 0.0
    %2463 = vmatprep.subr.mxu0 0.0
    %2464 = vmatpush1.msra.mxu0 0.0
    %2465 = vmatprep.subr.mxu0 0.0
    %2466 = vmatpush1.msra.mxu0 0.0
    %2467 = vmatprep.subr.mxu0 0.0
    %2468 = vmatpush1.msra.mxu0 0.0
    %2469 = vmatprep.subr.mxu0 0.0
    %2470 = vmatpush1.msra.mxu0 0.0
    %2471 = vmatprep.subr.mxu0 0.0
    %2472 = vmatpush1.msra.mxu0 0.0
    %2473 = vmatprep.subr.mxu0 0.0
    %2474 = vmatpush1.msra.mxu0 0.0
    %2475 = vmatprep.subr.mxu0 0.0
    %2476 = vmatpush1.msra.mxu0 0.0
    %2477 = vmatprep.subr.mxu0 0.0
    %2478 = vmatpush1.msra.mxu0 0.0
    %2479 = vmatprep.subr.mxu0 0.0
    %2480 = vmatpush1.msra.mxu0 0.0
    %2481 = vmatprep.subr.mxu0 0.0
    %2482 = vmatpush1.msra.mxu0 0.0
    %2483 = vmatprep.subr.mxu0 0.0
    %2484 = vmatpush1.msra.mxu0 0.0
    %2485 = vmatprep.subr.mxu0 0.0
    %2486 = vmatpush1.msra.mxu0 0.0
    %2487 = vmatprep.subr.mxu0 0.0
    %2488 = vmatpush1.msra.mxu0 0.0
    %2489 = vmatprep.subr.mxu0 0.0
    %2490 = vmatpush1.msra.mxu0 0.0
    %2491 = vmatprep.mubr.f32.mxu0 0.0
    %2492 = vmatmul.mubr.f32.gmra.mrb[0].mxu0 %v2285
    %v2493 = vpop.f32.mrb[0].mxu0
    %v2494 = vadd.f32 %v347, %v2493
    %v2495 = vpop.f32.mrb[0].mxu0
    %2496 = vdwg.mxu0
    %v2498 = vrot.slane %v2354, 1
    %v2499 = vrot.slane %v2354, 2
    %v2502 = vadd.f32 %v151, %v2498
    %v2503 = vadd.f32 %v152, %v2499
    %v2504 = vxor.u32 %v2502, 2147483648
    %v2505 = vxor.u32 %v2503, 2147483648
    %v2506 = vmul.f32 %v2504, 1.442695
    %v2507 = vpow.pop %v2506
    %v2508 = vmul.f32 %v2505, 1.442695
    %v2509 = vpow.pop %v2508
    %v2510 = vadd.f32 %v2507, 1.0
    %v2511 = vadd.f32 %v2509, 1.0
    %v2512 = vrcp.pop %v2510
    %v2513 = vmul.f32 1.0, %v2512
    %v2514 = vrcp.pop %v2511
    %v2515 = vmul.f32 1.0, %v2514
    %v2517 = vrot.slane %v2424, 1
    %v2518 = vrot.slane %v2424, 2
    %v2521 = vadd.f32 %v244, %v2517
    %v2522 = vadd.f32 %v245, %v2518
    %v2523 = vxor.u32 %v2521, 2147483648
    %v2524 = vxor.u32 %v2522, 2147483648
    %v2525 = vmul.f32 %v2523, 1.442695
    %v2526 = vpow.pop %v2525
    %v2527 = vmul.f32 %v2524, 1.442695
    %v2528 = vpow.pop %v2527
    %v2529 = vadd.f32 %v2526, 1.0
    %v2530 = vadd.f32 %v2528, 1.0
    %v2531 = vrcp.pop %v2529
    %v2532 = vmul.f32 1.0, %v2531
    %v2533 = vrcp.pop %v2530
    %v2534 = vmul.f32 1.0, %v2533
    %v2536 = vrot.slane %v2494, 1
    %v2537 = vrot.slane %v2494, 2
    %v2540 = vmul.f32 %v2513, %v2536
    %v2541 = vmul.f32 %v2515, %v2537
    %v2542 = vadd.f32 %v322, %v2540
    %v2543 = vadd.f32 %v327, %v2541
    %v2544 = vtanh.pop %v2542
    %v2545 = vtanh.pop %v2543
    %v2546 = vsub.f32 1.0, %v2532
    %v2547 = vsub.f32 1.0, %v2534
    %v2548 = vmul.f32 %v2546, %v2544
    %v2549 = vmul.f32 %v2547, %v2545
    %v2550 = vrot.slane %v2278, 7
    %v2551 = vrot.slane %v2279, 7
    %v2554 = vmul.f32 %v2532, %v2550
    %v2555 = vmul.f32 %v2534, %v2551
    %v2556 = vadd.f32 %v2548, %v2554
    %v2557 = vadd.f32 %v2549, %v2555
    %v2558 = vld [vmem:[%s13] sm:$0xff]
    %v2559 = vld [vmem:[%s13 + $0x8] sm:$0xff]
    %v2560 = vld [vmem:[%s13 + $0x10] sm:$0xff]
    %v2561 = vld [vmem:[%s13 + $0x18] sm:$0xff]
    %v2562 = vld [vmem:[%s14] sm:$0x1]
    %v2564 = vlaneseq
    %v2565 = vshrl.u32 %v2564, 7
    %v2566 = vsub.s32 0, %v2565
    %v2567 = vrot.slane %v2562, %v2566
    %v2571 = vrot.slane %v2556, 7
    %v2572 = vrot.slane %v2557, 6
    %v2573 = vsel %vm620, %v2572, %v2571
    %v2574 = vsel %vm349, %v2573, 0
    %2576 = vmatprep.subr.mxu0 0.0
    %2577 = vmatpush1.msra.mxu0 %v2558
    %2578 = vmatprep.subr.mxu0 0.0
    %2579 = vmatpush1.msra.mxu0 %v2559
    %2580 = vmatprep.subr.mxu0 0.0
    %2581 = vmatpush1.msra.mxu0 %v2560
    %2582 = vmatprep.subr.mxu0 0.0
    %2583 = vmatpush1.msra.mxu0 %v2561
    %2584 = vmatprep.subr.mxu0 0.0
    %2585 = vmatpush1.msra.mxu0 0.0
    %2586 = vmatprep.subr.mxu0 0.0
    %2587 = vmatpush1.msra.mxu0 0.0
    %2588 = vmatprep.subr.mxu0 0.0
    %2589 = vmatpush1.msra.mxu0 0.0
    %2590 = vmatprep.subr.mxu0 0.0
    %2591 = vmatpush1.msra.mxu0 0.0
    %2592 = vmatprep.subr.mxu0 0.0
    %2593 = vmatpush1.msra.mxu0 0.0
    %2594 = vmatprep.subr.mxu0 0.0
    %2595 = vmatpush1.msra.mxu0 0.0
    %2596 = vmatprep.subr.mxu0 0.0
    %2597 = vmatpush1.msra.mxu0 0.0
    %2598 = vmatprep.subr.mxu0 0.0
    %2599 = vmatpush1.msra.mxu0 0.0
    %2600 = vmatprep.subr.mxu0 0.0
    %2601 = vmatpush1.msra.mxu0 0.0
    %2602 = vmatprep.subr.mxu0 0.0
    %2603 = vmatpush1.msra.mxu0 0.0
    %2604 = vmatprep.subr.mxu0 0.0
    %2605 = vmatpush1.msra.mxu0 0.0
    %2606 = vmatprep.subr.mxu0 0.0
    %2607 = vmatpush1.msra.mxu0 0.0
    %2608 = vmatprep.subr.mxu0 0.0
    %2609 = vmatpush1.msra.mxu0 0.0
    %2610 = vmatprep.subr.mxu0 0.0
    %2611 = vmatpush1.msra.mxu0 0.0
    %2612 = vmatprep.subr.mxu0 0.0
    %2613 = vmatpush1.msra.mxu0 0.0
    %2614 = vmatprep.subr.mxu0 0.0
    %2615 = vmatpush1.msra.mxu0 0.0
    %2616 = vmatprep.subr.mxu0 0.0
    %2617 = vmatpush1.msra.mxu0 0.0
    %2618 = vmatprep.subr.mxu0 0.0
    %2619 = vmatpush1.msra.mxu0 0.0
    %2620 = vmatprep.subr.mxu0 0.0
    %2621 = vmatpush1.msra.mxu0 0.0
    %2622 = vmatprep.subr.mxu0 0.0
    %2623 = vmatpush1.msra.mxu0 0.0
    %2624 = vmatprep.subr.mxu0 0.0
    %2625 = vmatpush1.msra.mxu0 0.0
    %2626 = vmatprep.subr.mxu0 0.0
    %2627 = vmatpush1.msra.mxu0 0.0
    %2628 = vmatprep.subr.mxu0 0.0
    %2629 = vmatpush1.msra.mxu0 0.0
    %2630 = vmatprep.subr.mxu0 0.0
    %2631 = vmatpush1.msra.mxu0 0.0
    %2632 = vmatprep.subr.mxu0 0.0
    %2633 = vmatpush1.msra.mxu0 0.0
    %2634 = vmatprep.subr.mxu0 0.0
    %2635 = vmatpush1.msra.mxu0 0.0
    %2636 = vmatprep.subr.mxu0 0.0
    %2637 = vmatpush1.msra.mxu0 0.0
    %2638 = vmatprep.subr.mxu0 0.0
    %2639 = vmatpush1.msra.mxu0 0.0
    %2640 = vmatprep.mubr.f32.mxu0 0.0
    %2641 = vmatmul.mubr.f32.gmra.mrb[0].mxu0 %v2574
    %v2642 = vpop.f32.mrb[0].mxu0
    %v2643 = vadd.f32 %v2567, %v2642
    %v2644 = vpop.f32.mrb[0].mxu0
    %2645 = vdwg.mxu0
    %vm2646 = vcmask 25600
    %2647 = vst.msk [vmem:[#allocation2] sm:$0x3] %vm2646, %v2643
    // Predicated region
    $region62: #{gru_model_forward.1} parent=1 // pred_check
      _
    $region63: #{gru_model_forward.1} parent=1 // pred_check_branch
      %2649 = sbr.rel (0) target = $region65
    $region64: #{gru_model_forward.1} parent=1 // pred_region
      %s2651 = ssub.s32 32, 32
      %2652 = vsyncadd [#allocation3], %s2651
      %s2654 = sshll.u32 [#allocation2], 4
      %s2655 = int_to_ptr.vmem [resolvable:$true] %s2654
      %2657 = dma.vmem_to_hbm [thread:$0]  %s2655, 32, %s15, [#allocation3]
    $region65: #{gru_model_forward.1} parent=1 // pred_fallthru
      _
    // Predicated region
    $region66: #{gru_model_forward.1} parent=1 // pred_check
      _
    $region67: #{gru_model_forward.1} parent=1 // pred_check_branch
      %2659 = sbr.rel (0) target = $region69
    $region68: #{gru_model_forward.1} parent=1 // pred_region
      %2660 = dma.done [#allocation3], 32
    $region69: #{gru_model_forward.1} parent=1 // pred_fallthru
      _
    %2661 = vsyncpa [#allocation3], 1

</llo_original>
